<compile_context>
chip_gen: v7x
topology: tpu7x:2x2x1
jax: 0.10.0
libtpu: 0.0.40
codegen_flags: <defaults>
</compile_context>

<pallas_src>
import jax
import jax.numpy as jnp
from jax.experimental import pallas as pl
from jax.experimental.pallas import tpu as pltpu


NEG_SLOPE = 0.01          # F.leaky_relu default negative_slope
IN_DIM = 8                # Regression.input_dim
H1, H2, H3, H4 = 128, 128, 128, 64
OUT_DIM = 1
OUT_PAD = 128             # lane-dense padded width of the final layer


def _leaky_relu(v):
    return jnp.where(v > 0, v, NEG_SLOPE * v)


def regression_kernel(x_ref,
                      w1_ref, b1_ref,
                      w2_ref, b2_ref,
                      w3_ref, b3_ref,
                      w4_ref, b4_ref,
                      w5_ref, b5_ref,
                      o_ref):
    """Fused 5-layer forward pass for one (tile_m, IN_DIM) row tile."""
    cdt = w1_ref.dtype   # MXU input dtype (bf16 or f32); accumulation is f32.

    h = x_ref[...]
    h = _leaky_relu(
        jnp.dot(h.astype(cdt), w1_ref[...],
                preferred_element_type=jnp.float32) + b1_ref[...])
    h = _leaky_relu(
        jnp.dot(h.astype(cdt), w2_ref[...],
                preferred_element_type=jnp.float32) + b2_ref[...])
    h = _leaky_relu(
        jnp.dot(h.astype(cdt), w3_ref[...],
                preferred_element_type=jnp.float32) + b3_ref[...])
    h = _leaky_relu(
        jnp.dot(h.astype(cdt), w4_ref[...],
                preferred_element_type=jnp.float32) + b4_ref[...])
    out = jnp.dot(h.astype(cdt), w5_ref[...],
                  preferred_element_type=jnp.float32) + b5_ref[...]

    o_ref[...] = out.astype(o_ref.dtype)


def regression_forward(x, params, *, tile_m=None, compute_dtype=jnp.bfloat16):
    """x: (B, 8) float32; params: w1..w5 shaped (in, out), b1..b5 shaped (1, out)."""
    B, D = x.shape
    assert D == IN_DIM

    # Row-tile choice: >=128 rows keeps the MXU busy; cap at 256 so typical
    # batches still produce >=2 grid steps (megacore sharding on v7x).
    if tile_m is None:
        tile_m = min(256, max(B, 8))
    tile_m = max(8, (min(tile_m, max(B, 8)) // 8) * 8)

    grid_m = pl.cdiv(B, tile_m)
    b_pad = grid_m * tile_m
    if b_pad != B:
        x = jnp.pad(x, ((0, b_pad - B), (0, 0)))

    # Cast MXU operands to the compute dtype; biases / activation math stay f32.
    x_in = x.astype(compute_dtype)
    w1 = params["w1"].astype(compute_dtype)
    w2 = params["w2"].astype(compute_dtype)
    w3 = params["w3"].astype(compute_dtype)
    w4 = params["w4"].astype(compute_dtype)
    b1, b2, b3, b4 = params["b1"], params["b2"], params["b3"], params["b4"]

    # Zero-pad the final (64 -> 1) layer to a lane-dense (64 -> 128) layer so
    # the output store uses full 128-lane writes; column 0 carries the result.
    w5p = jnp.zeros((H4, OUT_PAD), jnp.float32).at[:, :OUT_DIM].set(params["w5"])
    b5p = jnp.zeros((1, OUT_PAD), jnp.float32).at[:, :OUT_DIM].set(params["b5"])
    w5p = w5p.astype(compute_dtype)

    def resident(shape):
        # Same block index every grid step -> stays resident in VMEM
        # (no per-step weight DMA).  Total weight footprint is only ~100-300 KB,
        # so no need to force single-buffering.
        return pl.BlockSpec(shape, lambda i: (0, 0))

    out_padded = pl.pallas_call(
        regression_kernel,
        out_shape=jax.ShapeDtypeStruct((b_pad, OUT_PAD), jnp.float32),
        grid_spec=pltpu.PrefetchScalarGridSpec(
            num_scalar_prefetch=0,
            grid=(grid_m,),
            in_specs=[
                pl.BlockSpec((tile_m, IN_DIM), lambda i: (i, 0)),   # x row tile
                resident(w1.shape), resident(b1.shape),
                resident(w2.shape), resident(b2.shape),
                resident(w3.shape), resident(b3.shape),
                resident(w4.shape), resident(b4.shape),
                resident(w5p.shape), resident(b5p.shape),
            ],
            out_specs=pl.BlockSpec((tile_m, OUT_PAD), lambda i: (i, 0)),
        ),
        compiler_params=pltpu.CompilerParams(
            dimension_semantics=("parallel",)),
    )(x_in, w1, b1, w2, b2, w3, b3, w4, b4, w5p, b5p)

    return out_padded[:B, :OUT_DIM]


def init_params(key):
    """nn.Linear default init: U(-1/sqrt(fan_in), +1/sqrt(fan_in)) for W and b."""
    dims = [(IN_DIM, H1), (H1, H2), (H2, H3), (H3, H4), (H4, OUT_DIM)]
    params = {}
    for idx, (fan_in, fan_out) in enumerate(dims, start=1):
        key, kw, kb = jax.random.split(key, 3)
        bound = 1.0 / jnp.sqrt(jnp.float32(fan_in))
        params[f"w{idx}"] = jax.random.uniform(
            kw, (fan_in, fan_out), jnp.float32, minval=-bound, maxval=bound)
        params[f"b{idx}"] = jax.random.uniform(
            kb, (1, fan_out), jnp.float32, minval=-bound, maxval=bound)
    return params


def reference_forward(x, params):
    h = x
    for idx in range(1, 5):
        h = h @ params[f"w{idx}"] + params[f"b{idx}"]
        h = jnp.where(h > 0, h, NEG_SLOPE * h)
    return h @ params["w5"] + params["b5"]


if __name__ == "__main__":
    key = jax.random.PRNGKey(0)
    key, kx = jax.random.split(key)

    B = 512                      # input feature dim fixed at 8 by the module
    x = jax.random.normal(kx, (B, IN_DIM), jnp.float32)
    params = init_params(key)

    ref = reference_forward(x, params)

    # Exact-semantics path (f32 MXU inputs).
    out_f32 = jax.block_until_ready(
        regression_forward(x, params, compute_dtype=jnp.float32))
    assert out_f32.shape == (B, OUT_DIM)
    assert jnp.allclose(out_f32, ref, atol=1e-5, rtol=1e-5), "f32 mismatch vs reference"

    # Fast path (default): bf16 MXU inputs, f32 accumulation.
    out_bf16 = jax.block_until_ready(regression_forward(x, params))
    assert out_bf16.shape == (B, OUT_DIM)
    assert jnp.allclose(out_bf16, ref, atol=5e-2, rtol=5e-2), "bf16 mismatch vs reference"

    # Small ragged batch exercises the row-padding path (tile_m clamps to 8).
    out_small = jax.block_until_ready(
        regression_forward(x[:10], params, compute_dtype=jnp.float32))
    assert out_small.shape == (10, OUT_DIM)
    assert jnp.allclose(out_small, ref[:10], atol=1e-5, rtol=1e-5), "small-batch mismatch"

    print("KERNEL_OK")
</pallas_src>

<mosaic_0001>
module attributes {stable_mosaic.version = 11 : i64} {
  func.func @regression_kernel(%arg0: i32, %arg1: memref<256x8xf32, #tpu.memory_space<vmem>>, %arg2: memref<8x128xf32, #tpu.memory_space<vmem>>, %arg3: memref<1x128xf32, #tpu.memory_space<vmem>>, %arg4: memref<128x128xf32, #tpu.memory_space<vmem>>, %arg5: memref<1x128xf32, #tpu.memory_space<vmem>>, %arg6: memref<128x128xf32, #tpu.memory_space<vmem>>, %arg7: memref<1x128xf32, #tpu.memory_space<vmem>>, %arg8: memref<128x64xf32, #tpu.memory_space<vmem>>, %arg9: memref<1x64xf32, #tpu.memory_space<vmem>>, %arg10: memref<64x128xf32, #tpu.memory_space<vmem>>, %arg11: memref<1x128xf32, #tpu.memory_space<vmem>>, %arg12: memref<256x128xf32, #tpu.memory_space<vmem>>) attributes {dimension_semantics = [#tpu.dimension_semantics<parallel>], iteration_bounds = array<i64: 2>, scalar_prefetch = 0 : i64, scratch_operands = 0 : i64, tpu.core_type = #tpu.core_type<tc>, window_params = [{transform_indices = @transform_0, window_bounds = array<i64: 256, 8>}, {pipeline_mode = #tpu.pipeline_mode<synchronous>, transform_indices = @transform_1, window_bounds = array<i64: 8, 128>}, {pipeline_mode = #tpu.pipeline_mode<synchronous>, transform_indices = @transform_2, window_bounds = array<i64: 1, 128>}, {pipeline_mode = #tpu.pipeline_mode<synchronous>, transform_indices = @transform_3, window_bounds = array<i64: 128, 128>}, {pipeline_mode = #tpu.pipeline_mode<synchronous>, transform_indices = @transform_4, window_bounds = array<i64: 1, 128>}, {pipeline_mode = #tpu.pipeline_mode<synchronous>, transform_indices = @transform_5, window_bounds = array<i64: 128, 128>}, {pipeline_mode = #tpu.pipeline_mode<synchronous>, transform_indices = @transform_6, window_bounds = array<i64: 1, 128>}, {pipeline_mode = #tpu.pipeline_mode<synchronous>, transform_indices = @transform_7, window_bounds = array<i64: 128, 64>}, {pipeline_mode = #tpu.pipeline_mode<synchronous>, transform_indices = @transform_8, window_bounds = array<i64: 1, 64>}, {pipeline_mode = #tpu.pipeline_mode<synchronous>, transform_indices = @transform_9, window_bounds = array<i64: 64, 128>}, {pipeline_mode = #tpu.pipeline_mode<synchronous>, transform_indices = @transform_10, window_bounds = array<i64: 1, 128>}, {transform_indices = @transform_11, window_bounds = array<i64: 256, 128>}]} {
    %c0 = arith.constant 0 : index
    %c0_0 = arith.constant 0 : index
    %0 = vector.load %arg1[%c0, %c0_0] : memref<256x8xf32, #tpu.memory_space<vmem>>, vector<256x8xf32>
    %c0_1 = arith.constant 0 : index
    %c0_2 = arith.constant 0 : index
    %1 = vector.load %arg2[%c0_1, %c0_2] : memref<8x128xf32, #tpu.memory_space<vmem>>, vector<8x128xf32>
    %cst = arith.constant dense<0.000000e+00> : vector<256x128xf32>
    %2 = tpu.matmul %0, %1, %cst {dimension_numbers = #tpu.dot_dimension_numbers<[1], [0], [0], [1], [0, 0, 1, 1], [], []>} : vector<256x8xf32>, vector<8x128xf32>, vector<256x128xf32> -> vector<256x128xf32>
    %c0_3 = arith.constant 0 : index
    %c0_4 = arith.constant 0 : index
    %3 = vector.load %arg3[%c0_3, %c0_4] : memref<1x128xf32, #tpu.memory_space<vmem>>, vector<1x128xf32>
    %4 = vector.broadcast %3 : vector<1x128xf32> to vector<256x128xf32>
    %5 = arith.addf %2, %4 : vector<256x128xf32>
    %cst_5 = arith.constant 0.000000e+00 : f32
    %6 = vector.broadcast %cst_5 : f32 to vector<256x128xf32>
    %7 = arith.cmpf ogt, %5, %6 : vector<256x128xf32>
    %cst_6 = arith.constant 0.00999999977 : f32
    %8 = vector.broadcast %cst_6 : f32 to vector<256x128xf32>
    %9 = arith.mulf %8, %5 : vector<256x128xf32>
    %10 = arith.select %7, %5, %9 : vector<256x128xi1>, vector<256x128xf32>
    %c0_7 = arith.constant 0 : index
    %c0_8 = arith.constant 0 : index
    %11 = vector.load %arg4[%c0_7, %c0_8] : memref<128x128xf32, #tpu.memory_space<vmem>>, vector<128x128xf32>
    %cst_9 = arith.constant dense<0.000000e+00> : vector<256x128xf32>
    %12 = tpu.matmul %10, %11, %cst_9 {dimension_numbers = #tpu.dot_dimension_numbers<[1], [0], [0], [1], [0, 0, 1, 1], [], []>} : vector<256x128xf32>, vector<128x128xf32>, vector<256x128xf32> -> vector<256x128xf32>
    %c0_10 = arith.constant 0 : index
    %c0_11 = arith.constant 0 : index
    %13 = vector.load %arg5[%c0_10, %c0_11] : memref<1x128xf32, #tpu.memory_space<vmem>>, vector<1x128xf32>
    %14 = vector.broadcast %13 : vector<1x128xf32> to vector<256x128xf32>
    %15 = arith.addf %12, %14 : vector<256x128xf32>
    %cst_12 = arith.constant 0.000000e+00 : f32
    %16 = vector.broadcast %cst_12 : f32 to vector<256x128xf32>
    %17 = arith.cmpf ogt, %15, %16 : vector<256x128xf32>
    %cst_13 = arith.constant 0.00999999977 : f32
    %18 = vector.broadcast %cst_13 : f32 to vector<256x128xf32>
    %19 = arith.mulf %18, %15 : vector<256x128xf32>
    %20 = arith.select %17, %15, %19 : vector<256x128xi1>, vector<256x128xf32>
    %c0_14 = arith.constant 0 : index
    %c0_15 = arith.constant 0 : index
    %21 = vector.load %arg6[%c0_14, %c0_15] : memref<128x128xf32, #tpu.memory_space<vmem>>, vector<128x128xf32>
    %cst_16 = arith.constant dense<0.000000e+00> : vector<256x128xf32>
    %22 = tpu.matmul %20, %21, %cst_16 {dimension_numbers = #tpu.dot_dimension_numbers<[1], [0], [0], [1], [0, 0, 1, 1], [], []>} : vector<256x128xf32>, vector<128x128xf32>, vector<256x128xf32> -> vector<256x128xf32>
    %c0_17 = arith.constant 0 : index
    %c0_18 = arith.constant 0 : index
    %23 = vector.load %arg7[%c0_17, %c0_18] : memref<1x128xf32, #tpu.memory_space<vmem>>, vector<1x128xf32>
    %24 = vector.broadcast %23 : vector<1x128xf32> to vector<256x128xf32>
    %25 = arith.addf %22, %24 : vector<256x128xf32>
    %cst_19 = arith.constant 0.000000e+00 : f32
    %26 = vector.broadcast %cst_19 : f32 to vector<256x128xf32>
    %27 = arith.cmpf ogt, %25, %26 : vector<256x128xf32>
    %cst_20 = arith.constant 0.00999999977 : f32
    %28 = vector.broadcast %cst_20 : f32 to vector<256x128xf32>
    %29 = arith.mulf %28, %25 : vector<256x128xf32>
    %30 = arith.select %27, %25, %29 : vector<256x128xi1>, vector<256x128xf32>
    %c0_21 = arith.constant 0 : index
    %c0_22 = arith.constant 0 : index
    %31 = vector.load %arg8[%c0_21, %c0_22] : memref<128x64xf32, #tpu.memory_space<vmem>>, vector<128x64xf32>
    %cst_23 = arith.constant dense<0.000000e+00> : vector<256x64xf32>
    %32 = tpu.matmul %30, %31, %cst_23 {dimension_numbers = #tpu.dot_dimension_numbers<[1], [0], [0], [1], [0, 0, 1, 1], [], []>} : vector<256x128xf32>, vector<128x64xf32>, vector<256x64xf32> -> vector<256x64xf32>
    %c0_24 = arith.constant 0 : index
    %c0_25 = arith.constant 0 : index
    %33 = vector.load %arg9[%c0_24, %c0_25] : memref<1x64xf32, #tpu.memory_space<vmem>>, vector<1x64xf32>
    %34 = vector.broadcast %33 : vector<1x64xf32> to vector<256x64xf32>
    %35 = arith.addf %32, %34 : vector<256x64xf32>
    %cst_26 = arith.constant 0.000000e+00 : f32
    %36 = vector.broadcast %cst_26 : f32 to vector<256x64xf32>
    %37 = arith.cmpf ogt, %35, %36 : vector<256x64xf32>
    %cst_27 = arith.constant 0.00999999977 : f32
    %38 = vector.broadcast %cst_27 : f32 to vector<256x64xf32>
    %39 = arith.mulf %38, %35 : vector<256x64xf32>
    %40 = arith.select %37, %35, %39 : vector<256x64xi1>, vector<256x64xf32>
    %c0_28 = arith.constant 0 : index
    %c0_29 = arith.constant 0 : index
    %41 = vector.load %arg10[%c0_28, %c0_29] : memref<64x128xf32, #tpu.memory_space<vmem>>, vector<64x128xf32>
    %cst_30 = arith.constant dense<0.000000e+00> : vector<256x128xf32>
    %42 = tpu.matmul %40, %41, %cst_30 {dimension_numbers = #tpu.dot_dimension_numbers<[1], [0], [0], [1], [0, 0, 1, 1], [], []>} : vector<256x64xf32>, vector<64x128xf32>, vector<256x128xf32> -> vector<256x128xf32>
    %c0_31 = arith.constant 0 : index
    %c0_32 = arith.constant 0 : index
    %43 = vector.load %arg11[%c0_31, %c0_32] : memref<1x128xf32, #tpu.memory_space<vmem>>, vector<1x128xf32>
    %44 = vector.broadcast %43 : vector<1x128xf32> to vector<256x128xf32>
    %45 = arith.addf %42, %44 : vector<256x128xf32>
    %c0_33 = arith.constant 0 : index
    %c0_34 = arith.constant 0 : index
    %46 = vector.load %arg12[%c0_33, %c0_34] : memref<256x128xf32, #tpu.memory_space<vmem>>, vector<256x128xf32>
    tpu.vector_store %arg12[%c0_33, %c0_34], %45 {strides = array<i32>} : memref<256x128xf32, #tpu.memory_space<vmem>>, vector<256x128xf32>,
    return
  }
  func.func @transform_0(%arg0: i32) -> (i32, i32) {
    %c0_i32 = arith.constant 0 : i32
    %c0_i32_0 = arith.constant 0 : i32
    return %arg0, %c0_i32 : i32, i32
  }
  func.func @transform_1(%arg0: i32) -> (i32, i32) {
    %c0_i32 = arith.constant 0 : i32
    %c0_i32_0 = arith.constant 0 : i32
    %c0_i32_1 = arith.constant 0 : i32
    return %c0_i32, %c0_i32_0 : i32, i32
  }
  func.func @transform_2(%arg0: i32) -> (i32, i32) {
    %c0_i32 = arith.constant 0 : i32
    %c0_i32_0 = arith.constant 0 : i32
    %c0_i32_1 = arith.constant 0 : i32
    return %c0_i32, %c0_i32_0 : i32, i32
  }
  func.func @transform_3(%arg0: i32) -> (i32, i32) {
    %c0_i32 = arith.constant 0 : i32
    %c0_i32_0 = arith.constant 0 : i32
    %c0_i32_1 = arith.constant 0 : i32
    return %c0_i32, %c0_i32_0 : i32, i32
  }
  func.func @transform_4(%arg0: i32) -> (i32, i32) {
    %c0_i32 = arith.constant 0 : i32
    %c0_i32_0 = arith.constant 0 : i32
    %c0_i32_1 = arith.constant 0 : i32
    return %c0_i32, %c0_i32_0 : i32, i32
  }
  func.func @transform_5(%arg0: i32) -> (i32, i32) {
    %c0_i32 = arith.constant 0 : i32
    %c0_i32_0 = arith.constant 0 : i32
    %c0_i32_1 = arith.constant 0 : i32
    return %c0_i32, %c0_i32_0 : i32, i32
  }
  func.func @transform_6(%arg0: i32) -> (i32, i32) {
    %c0_i32 = arith.constant 0 : i32
    %c0_i32_0 = arith.constant 0 : i32
    %c0_i32_1 = arith.constant 0 : i32
    return %c0_i32, %c0_i32_0 : i32, i32
  }
  func.func @transform_7(%arg0: i32) -> (i32, i32) {
    %c0_i32 = arith.constant 0 : i32
    %c0_i32_0 = arith.constant 0 : i32
    %c0_i32_1 = arith.constant 0 : i32
    return %c0_i32, %c0_i32_0 : i32, i32
  }
  func.func @transform_8(%arg0: i32) -> (i32, i32) {
    %c0_i32 = arith.constant 0 : i32
    %c0_i32_0 = arith.constant 0 : i32
    %c0_i32_1 = arith.constant 0 : i32
    return %c0_i32, %c0_i32_0 : i32, i32
  }
  func.func @transform_9(%arg0: i32) -> (i32, i32) {
    %c0_i32 = arith.constant 0 : i32
    %c0_i32_0 = arith.constant 0 : i32
    %c0_i32_1 = arith.constant 0 : i32
    return %c0_i32, %c0_i32_0 : i32, i32
  }
  func.func @transform_10(%arg0: i32) -> (i32, i32) {
    %c0_i32 = arith.constant 0 : i32
    %c0_i32_0 = arith.constant 0 : i32
    %c0_i32_1 = arith.constant 0 : i32
    return %c0_i32, %c0_i32_0 : i32, i32
  }
  func.func @transform_11(%arg0: i32) -> (i32, i32) {
    %c0_i32 = arith.constant 0 : i32
    %c0_i32_0 = arith.constant 0 : i32
    return %arg0, %c0_i32 : i32, i32
  }
}

</mosaic_0001>

<llo_original>
// kernel: tpu_custom_call.1
$region0: #{tpu_custom_call.1}
  #allocation0 [shape = 'u32[]', space=smem, size = 0x4, offset = 0x4, fixed_abs, tag = 'smem constant byte address 0x4 - core index']
  #allocation1 [shape = 'u32[144,128]{1,0:T(1,128)}', space=vmem, size = 0x12000, scoped, tag = 'internal scratch']
  %s0 = inlined_call_operand.vmem [shape: f32[512,8], index: 0, kind: input, shape index: {}]
  %s1 = inlined_call_operand.vmem [shape: f32[8,128], index: 1, kind: input, shape index: {}]
  %s2 = inlined_call_operand.vmem [shape: f32[1,128], index: 2, kind: input, shape index: {}]
  %s3 = inlined_call_operand.vmem [shape: f32[128,128], index: 3, kind: input, shape index: {}]
  %s4 = inlined_call_operand.vmem [shape: f32[1,128], index: 4, kind: input, shape index: {}]
  %s5 = inlined_call_operand.vmem [shape: f32[128,128], index: 5, kind: input, shape index: {}]
  %s6 = inlined_call_operand.vmem [shape: f32[1,128], index: 6, kind: input, shape index: {}]
  %s7 = inlined_call_operand.vmem [shape: f32[128,64], index: 7, kind: input, shape index: {}]
  %s8 = inlined_call_operand.vmem [shape: f32[1,64], index: 8, kind: input, shape index: {}]
  %s9 = inlined_call_operand.vmem [shape: f32[64,128], index: 9, kind: input, shape index: {}]
  %s10 = inlined_call_operand.vmem [shape: f32[1,128], index: 10, kind: input, shape index: {}]
  %s11 = inlined_call_operand.hbm [shape: f32[512,128], index: 11, kind: output, shape index: {}]
  %s12 = sld [smem:[#allocation0]]
  $region77: #{tpu_custom_call.1} parent=0
    _
  %s14 = ssub.s32 1, %s12
  %s15 = scalar_select 0, %s14, %s12
  $region1: #{tpu_custom_call.1} parent=0
    #allocation2 [shape = 'u8[262144]{0}', space=vmem, size = 0x40000, scoped, tag = 'output window, operand 0']
    #allocation3 [shape = 's32[2]{0}', space=sflag, size = 0x8, scoped, tag = 'scoped memory for tpu_custom_call.1']
    %16 = vsyncpa [#allocation3], 0
    %s17 = scalar_lea.sflag [#allocation3], 1
    %18 = vsyncpa %s17, 0
    loop: start=0, step=1, limit=4
    $region2: #{tpu_custom_call.1} parent=1 // loop_pre_header
      _
    $region3: #{tpu_custom_call.1} parent=1 // loop_header
      %s20 = sphi 0, %s24
      %p21 = scmp.ge.s32.totalorder %s20, 4
      %s30 = sphi 0, %s32
      %s33 = sphi 0, %s30
      %s34 = sphi 0, %s33
      %s50 = sphi 0, %s34
      %s54 = sphi 0, %s54
      %s56 = sphi 0, %s54
      %s57 = sphi 0, %s56
      %s71 = sphi 0, %s57
      %s75 = sphi 0, %s75
      %s77 = sphi 0, %s75
      %s78 = sphi 0, %s77
      %s92 = sphi 0, %s78
      %s96 = sphi 0, %s96
      %s98 = sphi 0, %s96
      %s99 = sphi 0, %s98
      %s113 = sphi 0, %s99
      %s117 = sphi 0, %s117
      %s119 = sphi 0, %s117
      %s120 = sphi 0, %s119
      %s134 = sphi 0, %s120
      %s138 = sphi 0, %s138
      %s140 = sphi 0, %s138
      %s141 = sphi 0, %s140
      %s155 = sphi 0, %s141
      %s159 = sphi 0, %s159
      %s161 = sphi 0, %s159
      %s162 = sphi 0, %s161
      %s176 = sphi 0, %s162
      %s180 = sphi 0, %s180
      %s182 = sphi 0, %s180
      %s183 = sphi 0, %s182
      %s197 = sphi 0, %s183
      %s201 = sphi 0, %s201
      %s203 = sphi 0, %s201
      %s204 = sphi 0, %s203
      %s218 = sphi 0, %s204
      %s222 = sphi 0, %s222
      %s224 = sphi 0, %s222
      %s225 = sphi 0, %s224
      %s239 = sphi 0, %s225
      %s243 = sphi 0, %s243
      %s245 = sphi 0, %s243
      %s246 = sphi 0, %s245
      %s260 = sphi 0, %s246
      %s266 = sphi 0, %s268
      %s269 = sphi 0, %s266
      %s270 = sphi 0, %s269
      %s286 = sphi 0, %s270
    $region4: #{tpu_custom_call.1} parent=1 // loop_header_branch
      %23 = sbr.rel (%p21) target = $region8
    $region5: #{tpu_custom_call.1} parent=1 // loop_body
      %s25 = ssub.s32 %s20, 1
      %s26 = ssub.s32 %s20, 2
      %s27 = sadd.s32 %s20, 1
      %s28 = ssub.s32 %s20, %s27
      %p29 = scmp.eq.s32.totalorder %s28, 0
      %s31 = sadd.s32 %s30, 1
      %s32 = scalar_select %p29, %s30, %s31
      %p35 = pneg %p29
      %p36 = scmp.eq.s32.totalorder %s20, 1
      %p37 = por %p35, %p36
      %p38 = scmp.ne.s32.totalorder %s30, %s33
      %p39 = scmp.eq.s32.totalorder %s20, 0
      %p40 = por %p38, %p39
      %p41 = scmp.ne.s32.totalorder %s30, %s33
      %p42 = scmp.eq.s32.totalorder %s25, 1
      %p43 = por %p41, %p42
      %p44 = scmp.ne.s32.totalorder %s33, %s34
      %p45 = scmp.eq.s32.totalorder %s25, 0
      %p46 = por %p44, %p45
      %p47 = scmp.ne.s32.totalorder %s33, %s34
      %p48 = scmp.eq.s32.totalorder %s26, 1
      %p49 = por %p47, %p48
      %p51 = scmp.ne.s32.totalorder %s34, %s50
      %p52 = scmp.eq.s32.totalorder %s26, 0
      %p53 = por %p51, %p52
      %s55 = sadd.s32 %s54, 1
      %p58 = scmp.eq.s32.totalorder %s20, 1
      %p59 = scmp.ne.s32.totalorder %s54, %s56
      %p60 = scmp.eq.s32.totalorder %s20, 0
      %p61 = por %p59, %p60
      %p62 = scmp.ne.s32.totalorder %s54, %s56
      %p63 = scmp.eq.s32.totalorder %s25, 1
      %p64 = por %p62, %p63
      %p65 = scmp.ne.s32.totalorder %s56, %s57
      %p66 = scmp.eq.s32.totalorder %s25, 0
      %p67 = por %p65, %p66
      %p68 = scmp.ne.s32.totalorder %s56, %s57
      %p69 = scmp.eq.s32.totalorder %s26, 1
      %p70 = por %p68, %p69
      %p72 = scmp.ne.s32.totalorder %s57, %s71
      %p73 = scmp.eq.s32.totalorder %s26, 0
      %p74 = por %p72, %p73
      %s76 = sadd.s32 %s75, 1
      %p79 = scmp.eq.s32.totalorder %s20, 1
      %p80 = scmp.ne.s32.totalorder %s75, %s77
      %p81 = scmp.eq.s32.totalorder %s20, 0
      %p82 = por %p80, %p81
      %p83 = scmp.ne.s32.totalorder %s75, %s77
      %p84 = scmp.eq.s32.totalorder %s25, 1
      %p85 = por %p83, %p84
      %p86 = scmp.ne.s32.totalorder %s77, %s78
      %p87 = scmp.eq.s32.totalorder %s25, 0
      %p88 = por %p86, %p87
      %p89 = scmp.ne.s32.totalorder %s77, %s78
      %p90 = scmp.eq.s32.totalorder %s26, 1
      %p91 = por %p89, %p90
      %p93 = scmp.ne.s32.totalorder %s78, %s92
      %p94 = scmp.eq.s32.totalorder %s26, 0
      %p95 = por %p93, %p94
      %s97 = sadd.s32 %s96, 1
      %p100 = scmp.eq.s32.totalorder %s20, 1
      %p101 = scmp.ne.s32.totalorder %s96, %s98
      %p102 = scmp.eq.s32.totalorder %s20, 0
      %p103 = por %p101, %p102
      %p104 = scmp.ne.s32.totalorder %s96, %s98
      %p105 = scmp.eq.s32.totalorder %s25, 1
      %p106 = por %p104, %p105
      %p107 = scmp.ne.s32.totalorder %s98, %s99
      %p108 = scmp.eq.s32.totalorder %s25, 0
      %p109 = por %p107, %p108
      %p110 = scmp.ne.s32.totalorder %s98, %s99
      %p111 = scmp.eq.s32.totalorder %s26, 1
      %p112 = por %p110, %p111
      %p114 = scmp.ne.s32.totalorder %s99, %s113
      %p115 = scmp.eq.s32.totalorder %s26, 0
      %p116 = por %p114, %p115
      %s118 = sadd.s32 %s117, 1
      %p121 = scmp.eq.s32.totalorder %s20, 1
      %p122 = scmp.ne.s32.totalorder %s117, %s119
      %p123 = scmp.eq.s32.totalorder %s20, 0
      %p124 = por %p122, %p123
      %p125 = scmp.ne.s32.totalorder %s117, %s119
      %p126 = scmp.eq.s32.totalorder %s25, 1
      %p127 = por %p125, %p126
      %p128 = scmp.ne.s32.totalorder %s119, %s120
      %p129 = scmp.eq.s32.totalorder %s25, 0
      %p130 = por %p128, %p129
      %p131 = scmp.ne.s32.totalorder %s119, %s120
      %p132 = scmp.eq.s32.totalorder %s26, 1
      %p133 = por %p131, %p132
      %p135 = scmp.ne.s32.totalorder %s120, %s134
      %p136 = scmp.eq.s32.totalorder %s26, 0
      %p137 = por %p135, %p136
      %s139 = sadd.s32 %s138, 1
      %p142 = scmp.eq.s32.totalorder %s20, 1
      %p143 = scmp.ne.s32.totalorder %s138, %s140
      %p144 = scmp.eq.s32.totalorder %s20, 0
      %p145 = por %p143, %p144
      %p146 = scmp.ne.s32.totalorder %s138, %s140
      %p147 = scmp.eq.s32.totalorder %s25, 1
      %p148 = por %p146, %p147
      %p149 = scmp.ne.s32.totalorder %s140, %s141
      %p150 = scmp.eq.s32.totalorder %s25, 0
      %p151 = por %p149, %p150
      %p152 = scmp.ne.s32.totalorder %s140, %s141
      %p153 = scmp.eq.s32.totalorder %s26, 1
      %p154 = por %p152, %p153
      %p156 = scmp.ne.s32.totalorder %s141, %s155
      %p157 = scmp.eq.s32.totalorder %s26, 0
      %p158 = por %p156, %p157
      %s160 = sadd.s32 %s159, 1
      %p163 = scmp.eq.s32.totalorder %s20, 1
      %p164 = scmp.ne.s32.totalorder %s159, %s161
      %p165 = scmp.eq.s32.totalorder %s20, 0
      %p166 = por %p164, %p165
      %p167 = scmp.ne.s32.totalorder %s159, %s161
      %p168 = scmp.eq.s32.totalorder %s25, 1
      %p169 = por %p167, %p168
      %p170 = scmp.ne.s32.totalorder %s161, %s162
      %p171 = scmp.eq.s32.totalorder %s25, 0
      %p172 = por %p170, %p171
      %p173 = scmp.ne.s32.totalorder %s161, %s162
      %p174 = scmp.eq.s32.totalorder %s26, 1
      %p175 = por %p173, %p174
      %p177 = scmp.ne.s32.totalorder %s162, %s176
      %p178 = scmp.eq.s32.totalorder %s26, 0
      %p179 = por %p177, %p178
      %s181 = sadd.s32 %s180, 1
      %p184 = scmp.eq.s32.totalorder %s20, 1
      %p185 = scmp.ne.s32.totalorder %s180, %s182
      %p186 = scmp.eq.s32.totalorder %s20, 0
      %p187 = por %p185, %p186
      %p188 = scmp.ne.s32.totalorder %s180, %s182
      %p189 = scmp.eq.s32.totalorder %s25, 1
      %p190 = por %p188, %p189
      %p191 = scmp.ne.s32.totalorder %s182, %s183
      %p192 = scmp.eq.s32.totalorder %s25, 0
      %p193 = por %p191, %p192
      %p194 = scmp.ne.s32.totalorder %s182, %s183
      %p195 = scmp.eq.s32.totalorder %s26, 1
      %p196 = por %p194, %p195
      %p198 = scmp.ne.s32.totalorder %s183, %s197
      %p199 = scmp.eq.s32.totalorder %s26, 0
      %p200 = por %p198, %p199
      %s202 = sadd.s32 %s201, 1
      %p205 = scmp.eq.s32.totalorder %s20, 1
      %p206 = scmp.ne.s32.totalorder %s201, %s203
      %p207 = scmp.eq.s32.totalorder %s20, 0
      %p208 = por %p206, %p207
      %p209 = scmp.ne.s32.totalorder %s201, %s203
      %p210 = scmp.eq.s32.totalorder %s25, 1
      %p211 = por %p209, %p210
      %p212 = scmp.ne.s32.totalorder %s203, %s204
      %p213 = scmp.eq.s32.totalorder %s25, 0
      %p214 = por %p212, %p213
      %p215 = scmp.ne.s32.totalorder %s203, %s204
      %p216 = scmp.eq.s32.totalorder %s26, 1
      %p217 = por %p215, %p216
      %p219 = scmp.ne.s32.totalorder %s204, %s218
      %p220 = scmp.eq.s32.totalorder %s26, 0
      %p221 = por %p219, %p220
      %s223 = sadd.s32 %s222, 1
      %p226 = scmp.eq.s32.totalorder %s20, 1
      %p227 = scmp.ne.s32.totalorder %s222, %s224
      %p228 = scmp.eq.s32.totalorder %s20, 0
      %p229 = por %p227, %p228
      %p230 = scmp.ne.s32.totalorder %s222, %s224
      %p231 = scmp.eq.s32.totalorder %s25, 1
      %p232 = por %p230, %p231
      %p233 = scmp.ne.s32.totalorder %s224, %s225
      %p234 = scmp.eq.s32.totalorder %s25, 0
      %p235 = por %p233, %p234
      %p236 = scmp.ne.s32.totalorder %s224, %s225
      %p237 = scmp.eq.s32.totalorder %s26, 1
      %p238 = por %p236, %p237
      %p240 = scmp.ne.s32.totalorder %s225, %s239
      %p241 = scmp.eq.s32.totalorder %s26, 0
      %p242 = por %p240, %p241
      %s244 = sadd.s32 %s243, 1
      %p247 = scmp.eq.s32.totalorder %s20, 1
      %p248 = scmp.ne.s32.totalorder %s243, %s245
      %p249 = scmp.eq.s32.totalorder %s20, 0
      %p250 = por %p248, %p249
      %p251 = scmp.ne.s32.totalorder %s243, %s245
      %p252 = scmp.eq.s32.totalorder %s25, 1
      %p253 = por %p251, %p252
      %p254 = scmp.ne.s32.totalorder %s245, %s246
      %p255 = scmp.eq.s32.totalorder %s25, 0
      %p256 = por %p254, %p255
      %p257 = scmp.ne.s32.totalorder %s245, %s246
      %p258 = scmp.eq.s32.totalorder %s26, 1
      %p259 = por %p257, %p258
      %p261 = scmp.ne.s32.totalorder %s246, %s260
      %p262 = scmp.eq.s32.totalorder %s26, 0
      %p263 = por %p261, %p262
      %s264 = ssub.s32 %s20, %s27
      %p265 = scmp.eq.s32.totalorder %s264, 0
      %s267 = sadd.s32 %s266, 1
      %s268 = scalar_select %p265, %s266, %s267
      %p271 = pneg %p265
      %p272 = scmp.eq.s32.totalorder %s20, 1
      %p273 = por %p271, %p272
      %p274 = scmp.ne.s32.totalorder %s266, %s269
      %p275 = scmp.eq.s32.totalorder %s20, 0
      %p276 = por %p274, %p275
      %p277 = scmp.ne.s32.totalorder %s266, %s269
      %p278 = scmp.eq.s32.totalorder %s25, 1
      %p279 = por %p277, %p278
      %p280 = scmp.ne.s32.totalorder %s269, %s270
      %p281 = scmp.eq.s32.totalorder %s25, 0
      %p282 = por %p280, %p281
      %p283 = scmp.ne.s32.totalorder %s269, %s270
      %p284 = scmp.eq.s32.totalorder %s26, 1
      %p285 = por %p283, %p284
      %p287 = scmp.ne.s32.totalorder %s270, %s286
      %p288 = scmp.eq.s32.totalorder %s26, 0
      %p289 = por %p287, %p288
      %p290 = scmp.le.s32.totalorder 1, %s20
      %p291 = scmp.lt.s32.totalorder %s20, 3
      %p292 = pnand %p290, %p291
      %p293 = pneg %p292
      // Predicated region
      $region9: #{tpu_custom_call.1} parent=5 // pred_check
        _
      $region10: #{tpu_custom_call.1} parent=5 // pred_check_branch
        %295 = sbr.rel (%p292) target = $region12
      $region11: #{tpu_custom_call.1} parent=5 // pred_region
        %s296 = ssub.s32 %s20, 1
        // Predicated region
        $region13: #{tpu_custom_call.1} parent=11 // pred_check
          %p297 = pneg %p67
        $region14: #{tpu_custom_call.1} parent=11 // pred_check_branch
          %299 = sbr.rel (%p297) target = $region16
        $region15: #{tpu_custom_call.1} parent=11 // pred_region
          _
        $region16: #{tpu_custom_call.1} parent=11 // pred_fallthru
          _
        // Predicated region
        $region17: #{tpu_custom_call.1} parent=11 // pred_check
          %p300 = pneg %p88
        $region18: #{tpu_custom_call.1} parent=11 // pred_check_branch
          %302 = sbr.rel (%p300) target = $region20
        $region19: #{tpu_custom_call.1} parent=11 // pred_region
          _
        $region20: #{tpu_custom_call.1} parent=11 // pred_fallthru
          _
        // Predicated region
        $region21: #{tpu_custom_call.1} parent=11 // pred_check
          %p303 = pneg %p109
        $region22: #{tpu_custom_call.1} parent=11 // pred_check_branch
          %305 = sbr.rel (%p303) target = $region24
        $region23: #{tpu_custom_call.1} parent=11 // pred_region
          _
        $region24: #{tpu_custom_call.1} parent=11 // pred_fallthru
          _
        // Predicated region
        $region25: #{tpu_custom_call.1} parent=11 // pred_check
          %p306 = pneg %p130
        $region26: #{tpu_custom_call.1} parent=11 // pred_check_branch
          %308 = sbr.rel (%p306) target = $region28
        $region27: #{tpu_custom_call.1} parent=11 // pred_region
          _
        $region28: #{tpu_custom_call.1} parent=11 // pred_fallthru
          _
        // Predicated region
        $region29: #{tpu_custom_call.1} parent=11 // pred_check
          %p309 = pneg %p151
        $region30: #{tpu_custom_call.1} parent=11 // pred_check_branch
          %311 = sbr.rel (%p309) target = $region32
        $region31: #{tpu_custom_call.1} parent=11 // pred_region
          _
        $region32: #{tpu_custom_call.1} parent=11 // pred_fallthru
          _
        // Predicated region
        $region33: #{tpu_custom_call.1} parent=11 // pred_check
          %p312 = pneg %p172
        $region34: #{tpu_custom_call.1} parent=11 // pred_check_branch
          %314 = sbr.rel (%p312) target = $region36
        $region35: #{tpu_custom_call.1} parent=11 // pred_region
          _
        $region36: #{tpu_custom_call.1} parent=11 // pred_fallthru
          _
        // Predicated region
        $region37: #{tpu_custom_call.1} parent=11 // pred_check
          %p315 = pneg %p193
        $region38: #{tpu_custom_call.1} parent=11 // pred_check_branch
          %317 = sbr.rel (%p315) target = $region40
        $region39: #{tpu_custom_call.1} parent=11 // pred_region
          _
        $region40: #{tpu_custom_call.1} parent=11 // pred_fallthru
          _
        // Predicated region
        $region41: #{tpu_custom_call.1} parent=11 // pred_check
          %p318 = pneg %p214
        $region42: #{tpu_custom_call.1} parent=11 // pred_check_branch
          %320 = sbr.rel (%p318) target = $region44
        $region43: #{tpu_custom_call.1} parent=11 // pred_region
          _
        $region44: #{tpu_custom_call.1} parent=11 // pred_fallthru
          _
        // Predicated region
        $region45: #{tpu_custom_call.1} parent=11 // pred_check
          %p321 = pneg %p235
        $region46: #{tpu_custom_call.1} parent=11 // pred_check_branch
          %323 = sbr.rel (%p321) target = $region48
        $region47: #{tpu_custom_call.1} parent=11 // pred_region
          _
        $region48: #{tpu_custom_call.1} parent=11 // pred_fallthru
          _
        // Predicated region
        $region49: #{tpu_custom_call.1} parent=11 // pred_check
          %p324 = pneg %p256
        $region50: #{tpu_custom_call.1} parent=11 // pred_check_branch
          %326 = sbr.rel (%p324) target = $region52
        $region51: #{tpu_custom_call.1} parent=11 // pred_region
          _
        $region52: #{tpu_custom_call.1} parent=11 // pred_fallthru
          _
      $region12: #{tpu_custom_call.1} parent=5 // pred_fallthru
        _
      %p327 = scmp.lt.s32.totalorder %s20, 2
      // Predicated region
      $region53: #{tpu_custom_call.1} parent=5 // pred_check
        %p328 = pneg %p327
      $region54: #{tpu_custom_call.1} parent=5 // pred_check_branch
        %330 = sbr.rel (%p328) target = $region56
      $region55: #{tpu_custom_call.1} parent=5 // pred_region
        // Predicated region
        $region57: #{tpu_custom_call.1} parent=55 // pred_check
          %p331 = pneg %p40
        $region58: #{tpu_custom_call.1} parent=55 // pred_check_branch
          %333 = sbr.rel (%p331) target = $region60
        $region59: #{tpu_custom_call.1} parent=55 // pred_region
          %s334 = smul.u32 32, %s20
          %p335 = scmp.lt.s32.totalorder %s334, 63
          %s336 = scalar_select %p335, %s334, 63
          %s337 = smul.addr %s336, 8
          %s338 = scalar_lea.vmem %s0, %s337
          %s339 = smul.u32 32, %s20
        $region60: #{tpu_custom_call.1} parent=55 // pred_fallthru
          _
      $region56: #{tpu_custom_call.1} parent=5 // pred_fallthru
        _
      %p340 = scmp.le.s32.totalorder 1, %s20
      %p341 = scmp.lt.s32.totalorder %s20, 3
      %p342 = pnand %p340, %p341
      %p343 = pneg %p342
      // Predicated region
      $region61: #{tpu_custom_call.1} parent=5 // pred_check
        _
      $region62: #{tpu_custom_call.1} parent=5 // pred_check_branch
        %345 = sbr.rel (%p342) target = $region64
      $region63: #{tpu_custom_call.1} parent=5 // pred_region
        %s346 = ssub.s32 %s20, 1
        %s347 = smul.u32 32, %s25
        %p348 = scmp.lt.s32.totalorder %s347, 63
        %s349 = scalar_select %p348, %s347, 63
        %s350 = smul.addr %s349, 8
        %s351 = scalar_lea.vmem %s0, %s350
        %p352 = pneg %p46
        %p353 = pneg %p43
        %p354 = pneg %p67
        %p355 = pneg %p64
        %p356 = pneg %p88
        %p357 = pneg %p85
        %p358 = pneg %p109
        %p359 = pneg %p106
        %p360 = pneg %p130
        %p361 = pneg %p127
        %p362 = pneg %p151
        %p363 = pneg %p148
        %p364 = pneg %p172
        %p365 = pneg %p169
        %p366 = pneg %p193
        %p367 = pneg %p190
        %p368 = pneg %p214
        %p369 = pneg %p211
        %p370 = pneg %p235
        %p371 = pneg %p232
        %p372 = pneg %p256
        %p373 = pneg %p253
        %p374 = pneg %p282
        %p375 = pneg %p279
        %s376 = sand.u32 %s269, 1
        %s377 = scalar_lea.sflag [#allocation3], %s376
        %s378 = sand.u32 %s269, 1
        %s379 = smul.addr %s378, 256
        %s380 = scalar_lea.vmem [#allocation2], %s379
        %s381 = smul.u32 32, %s25
        %p382 = scmp.lt.s32.totalorder %s381, 63
        %s383 = scalar_select %p382, %s381, 63
        %s384 = smul.addr %s383, 8
        %s385 = scalar_lea.vmem %s0, %s384
        %s386 = smul.u32 32, %s25
        %s387 = smul.u32 32, %s25
        %v388 = vld [vmem:[%s385] sm:$0xff]
        %v389 = vld [vmem:[%s385 + $0x8] sm:$0xff]
        %v390 = vld [vmem:[%s385 + $0x10] sm:$0xff]
        %v391 = vld [vmem:[%s385 + $0x18] sm:$0xff]
        %v392 = vld [vmem:[%s385 + $0x20] sm:$0xff]
        %v393 = vld [vmem:[%s385 + $0x28] sm:$0xff]
        %v394 = vld [vmem:[%s385 + $0x30] sm:$0xff]
        %v395 = vld [vmem:[%s385 + $0x38] sm:$0xff]
        %v396 = vld [vmem:[%s385 + $0x40] sm:$0xff]
        %v397 = vld [vmem:[%s385 + $0x48] sm:$0xff]
        %v398 = vld [vmem:[%s385 + $0x50] sm:$0xff]
        %v399 = vld [vmem:[%s385 + $0x58] sm:$0xff]
        %v400 = vld [vmem:[%s385 + $0x60] sm:$0xff]
        %v401 = vld [vmem:[%s385 + $0x68] sm:$0xff]
        %v402 = vld [vmem:[%s385 + $0x70] sm:$0xff]
        %v403 = vld [vmem:[%s385 + $0x78] sm:$0xff]
        %v404 = vld [vmem:[%s385 + $0x80] sm:$0xff]
        %v405 = vld [vmem:[%s385 + $0x88] sm:$0xff]
        %v406 = vld [vmem:[%s385 + $0x90] sm:$0xff]
        %v407 = vld [vmem:[%s385 + $0x98] sm:$0xff]
        %v408 = vld [vmem:[%s385 + $0xa0] sm:$0xff]
        %v409 = vld [vmem:[%s385 + $0xa8] sm:$0xff]
        %v410 = vld [vmem:[%s385 + $0xb0] sm:$0xff]
        %v411 = vld [vmem:[%s385 + $0xb8] sm:$0xff]
        %v412 = vld [vmem:[%s385 + $0xc0] sm:$0xff]
        %v413 = vld [vmem:[%s385 + $0xc8] sm:$0xff]
        %v414 = vld [vmem:[%s385 + $0xd0] sm:$0xff]
        %v415 = vld [vmem:[%s385 + $0xd8] sm:$0xff]
        %v416 = vld [vmem:[%s385 + $0xe0] sm:$0xff]
        %v417 = vld [vmem:[%s385 + $0xe8] sm:$0xff]
        %v418 = vld [vmem:[%s385 + $0xf0] sm:$0xff]
        %v419 = vld [vmem:[%s385 + $0xf8] sm:$0xff]
        %v420 = vld [vmem:[%s1] sm:$0xff]
        %v421 = vld [vmem:[%s2] sm:$0x1]
        %v423 = vlaneseq
        %v424 = vshrl.u32 %v423, 7
        %v425 = vsub.s32 0, %v424
        %v426 = vrot.slane %v421, %v425
        %vm428 = vcmask 64512
        %v430 = vsel %vm428, %v388, 0
        %v433 = vsel %vm428, %v389, 0
        %v436 = vsel %vm428, %v390, 0
        %v439 = vsel %vm428, %v391, 0
        %v442 = vsel %vm428, %v392, 0
        %v445 = vsel %vm428, %v393, 0
        %v448 = vsel %vm428, %v394, 0
        %v451 = vsel %vm428, %v395, 0
        %v454 = vsel %vm428, %v396, 0
        %v457 = vsel %vm428, %v397, 0
        %v460 = vsel %vm428, %v398, 0
        %v463 = vsel %vm428, %v399, 0
        %v466 = vsel %vm428, %v400, 0
        %v469 = vsel %vm428, %v401, 0
        %v472 = vsel %vm428, %v402, 0
        %v475 = vsel %vm428, %v403, 0
        %v478 = vsel %vm428, %v404, 0
        %v481 = vsel %vm428, %v405, 0
        %v484 = vsel %vm428, %v406, 0
        %v487 = vsel %vm428, %v407, 0
        %v490 = vsel %vm428, %v408, 0
        %v493 = vsel %vm428, %v409, 0
        %v496 = vsel %vm428, %v410, 0
        %v499 = vsel %vm428, %v411, 0
        %v502 = vsel %vm428, %v412, 0
        %v505 = vsel %vm428, %v413, 0
        %v508 = vsel %vm428, %v414, 0
        %v511 = vsel %vm428, %v415, 0
        %v514 = vsel %vm428, %v416, 0
        %v517 = vsel %vm428, %v417, 0
        %v520 = vsel %vm428, %v418, 0
        %v523 = vsel %vm428, %v419, 0
        %525 = vmatprep.subr.mxu0 0.0
        %526 = vmatpush1.msra.mxu0 %v420
        %527 = vmatprep.subr.mxu0 0.0
        %528 = vmatpush1.msra.mxu0 0.0
        %529 = vmatprep.subr.mxu0 0.0
        %530 = vmatpush1.msra.mxu0 0.0
        %531 = vmatprep.subr.mxu0 0.0
        %532 = vmatpush1.msra.mxu0 0.0
        %533 = vmatprep.subr.mxu0 0.0
        %534 = vmatpush1.msra.mxu0 0.0
        %535 = vmatprep.subr.mxu0 0.0
        %536 = vmatpush1.msra.mxu0 0.0
        %537 = vmatprep.subr.mxu0 0.0
        %538 = vmatpush1.msra.mxu0 0.0
        %539 = vmatprep.subr.mxu0 0.0
        %540 = vmatpush1.msra.mxu0 0.0
        %541 = vmatprep.subr.mxu0 0.0
        %542 = vmatpush1.msra.mxu0 0.0
        %543 = vmatprep.subr.mxu0 0.0
        %544 = vmatpush1.msra.mxu0 0.0
        %545 = vmatprep.subr.mxu0 0.0
        %546 = vmatpush1.msra.mxu0 0.0
        %547 = vmatprep.subr.mxu0 0.0
        %548 = vmatpush1.msra.mxu0 0.0
        %549 = vmatprep.subr.mxu0 0.0
        %550 = vmatpush1.msra.mxu0 0.0
        %551 = vmatprep.subr.mxu0 0.0
        %552 = vmatpush1.msra.mxu0 0.0
        %553 = vmatprep.subr.mxu0 0.0
        %554 = vmatpush1.msra.mxu0 0.0
        %555 = vmatprep.subr.mxu0 0.0
        %556 = vmatpush1.msra.mxu0 0.0
        %557 = vmatprep.subr.mxu0 0.0
        %558 = vmatpush1.msra.mxu0 0.0
        %559 = vmatprep.subr.mxu0 0.0
        %560 = vmatpush1.msra.mxu0 0.0
        %561 = vmatprep.subr.mxu0 0.0
        %562 = vmatpush1.msra.mxu0 0.0
        %563 = vmatprep.subr.mxu0 0.0
        %564 = vmatpush1.msra.mxu0 0.0
        %565 = vmatprep.subr.mxu0 0.0
        %566 = vmatpush1.msra.mxu0 0.0
        %567 = vmatprep.subr.mxu0 0.0
        %568 = vmatpush1.msra.mxu0 0.0
        %569 = vmatprep.subr.mxu0 0.0
        %570 = vmatpush1.msra.mxu0 0.0
        %571 = vmatprep.subr.mxu0 0.0
        %572 = vmatpush1.msra.mxu0 0.0
        %573 = vmatprep.subr.mxu0 0.0
        %574 = vmatpush1.msra.mxu0 0.0
        %575 = vmatprep.subr.mxu0 0.0
        %576 = vmatpush1.msra.mxu0 0.0
        %577 = vmatprep.subr.mxu0 0.0
        %578 = vmatpush1.msra.mxu0 0.0
        %579 = vmatprep.subr.mxu0 0.0
        %580 = vmatpush1.msra.mxu0 0.0
        %581 = vmatprep.subr.mxu0 0.0
        %582 = vmatpush1.msra.mxu0 0.0
        %583 = vmatprep.subr.mxu0 0.0
        %584 = vmatpush1.msra.mxu0 0.0
        %585 = vmatprep.subr.mxu0 0.0
        %586 = vmatpush1.msra.mxu0 0.0
        %587 = vmatprep.subr.mxu0 0.0
        %588 = vmatpush1.msra.mxu0 0.0
        %589 = vmatprep.mubr.f32.mxu0 0.0
        %590 = vmatmul.mubr.f32.gmra.mrb[0].mxu0 %v430
        %v591 = vpop.f32.mrb[0].mxu0
        %v592 = vadd.f32 %v426, %v591
        %v593 = vpop.f32.mrb[0].mxu0
        %594 = vmatprep.mubr.f32.mxu0 0.0
        %595 = vmatmul.mubr.f32.gmra.mrb[0].mxu0 %v433
        %v596 = vpop.f32.mrb[0].mxu0
        %v597 = vadd.f32 %v426, %v596
        %v598 = vpop.f32.mrb[0].mxu0
        %599 = vmatprep.mubr.f32.mxu0 0.0
        %600 = vmatmul.mubr.f32.gmra.mrb[0].mxu0 %v436
        %v601 = vpop.f32.mrb[0].mxu0
        %v602 = vadd.f32 %v426, %v601
        %v603 = vpop.f32.mrb[0].mxu0
        %604 = vmatprep.mubr.f32.mxu0 0.0
        %605 = vmatmul.mubr.f32.gmra.mrb[0].mxu0 %v439
        %v606 = vpop.f32.mrb[0].mxu0
        %v607 = vadd.f32 %v426, %v606
        %v608 = vpop.f32.mrb[0].mxu0
        %609 = vmatprep.mubr.f32.mxu0 0.0
        %610 = vmatmul.mubr.f32.gmra.mrb[0].mxu0 %v442
        %v611 = vpop.f32.mrb[0].mxu0
        %v612 = vadd.f32 %v426, %v611
        %v613 = vpop.f32.mrb[0].mxu0
        %614 = vmatprep.mubr.f32.mxu0 0.0
        %615 = vmatmul.mubr.f32.gmra.mrb[0].mxu0 %v445
        %v616 = vpop.f32.mrb[0].mxu0
        %v617 = vadd.f32 %v426, %v616
        %v618 = vpop.f32.mrb[0].mxu0
        %619 = vmatprep.mubr.f32.mxu0 0.0
        %620 = vmatmul.mubr.f32.gmra.mrb[0].mxu0 %v448
        %v621 = vpop.f32.mrb[0].mxu0
        %v622 = vadd.f32 %v426, %v621
        %v623 = vpop.f32.mrb[0].mxu0
        %624 = vmatprep.mubr.f32.mxu0 0.0
        %625 = vmatmul.mubr.f32.gmra.mrb[0].mxu0 %v451
        %v626 = vpop.f32.mrb[0].mxu0
        %v627 = vadd.f32 %v426, %v626
        %v628 = vpop.f32.mrb[0].mxu0
        %629 = vmatprep.mubr.f32.mxu0 0.0
        %630 = vmatmul.mubr.f32.gmra.mrb[0].mxu0 %v454
        %v631 = vpop.f32.mrb[0].mxu0
        %v632 = vadd.f32 %v426, %v631
        %v633 = vpop.f32.mrb[0].mxu0
        %634 = vmatprep.mubr.f32.mxu0 0.0
        %635 = vmatmul.mubr.f32.gmra.mrb[0].mxu0 %v457
        %v636 = vpop.f32.mrb[0].mxu0
        %v637 = vadd.f32 %v426, %v636
        %v638 = vpop.f32.mrb[0].mxu0
        %639 = vmatprep.mubr.f32.mxu0 0.0
        %640 = vmatmul.mubr.f32.gmra.mrb[0].mxu0 %v460
        %v641 = vpop.f32.mrb[0].mxu0
        %v642 = vadd.f32 %v426, %v641
        %v643 = vpop.f32.mrb[0].mxu0
        %644 = vmatprep.mubr.f32.mxu0 0.0
        %645 = vmatmul.mubr.f32.gmra.mrb[0].mxu0 %v463
        %v646 = vpop.f32.mrb[0].mxu0
        %v647 = vadd.f32 %v426, %v646
        %v648 = vpop.f32.mrb[0].mxu0
        %649 = vmatprep.mubr.f32.mxu0 0.0
        %650 = vmatmul.mubr.f32.gmra.mrb[0].mxu0 %v466
        %v651 = vpop.f32.mrb[0].mxu0
        %v652 = vadd.f32 %v426, %v651
        %v653 = vpop.f32.mrb[0].mxu0
        %654 = vmatprep.mubr.f32.mxu0 0.0
        %655 = vmatmul.mubr.f32.gmra.mrb[0].mxu0 %v469
        %v656 = vpop.f32.mrb[0].mxu0
        %v657 = vadd.f32 %v426, %v656
        %v658 = vpop.f32.mrb[0].mxu0
        %659 = vmatprep.mubr.f32.mxu0 0.0
        %660 = vmatmul.mubr.f32.gmra.mrb[0].mxu0 %v472
        %v661 = vpop.f32.mrb[0].mxu0
        %v662 = vadd.f32 %v426, %v661
        %v663 = vpop.f32.mrb[0].mxu0
        %664 = vmatprep.mubr.f32.mxu0 0.0
        %665 = vmatmul.mubr.f32.gmra.mrb[0].mxu0 %v475
        %v666 = vpop.f32.mrb[0].mxu0
        %v667 = vadd.f32 %v426, %v666
        %v668 = vpop.f32.mrb[0].mxu0
        %669 = vmatprep.mubr.f32.mxu0 0.0
        %670 = vmatmul.mubr.f32.gmra.mrb[0].mxu0 %v478
        %v671 = vpop.f32.mrb[0].mxu0
        %v672 = vadd.f32 %v426, %v671
        %v673 = vpop.f32.mrb[0].mxu0
        %674 = vmatprep.mubr.f32.mxu0 0.0
        %675 = vmatmul.mubr.f32.gmra.mrb[0].mxu0 %v481
        %v676 = vpop.f32.mrb[0].mxu0
        %v677 = vadd.f32 %v426, %v676
        %v678 = vpop.f32.mrb[0].mxu0
        %679 = vmatprep.mubr.f32.mxu0 0.0
        %680 = vmatmul.mubr.f32.gmra.mrb[0].mxu0 %v484
        %v681 = vpop.f32.mrb[0].mxu0
        %v682 = vadd.f32 %v426, %v681
        %v683 = vpop.f32.mrb[0].mxu0
        %684 = vmatprep.mubr.f32.mxu0 0.0
        %685 = vmatmul.mubr.f32.gmra.mrb[0].mxu0 %v487
        %v686 = vpop.f32.mrb[0].mxu0
        %v687 = vadd.f32 %v426, %v686
        %v688 = vpop.f32.mrb[0].mxu0
        %689 = vmatprep.mubr.f32.mxu0 0.0
        %690 = vmatmul.mubr.f32.gmra.mrb[0].mxu0 %v490
        %v691 = vpop.f32.mrb[0].mxu0
        %v692 = vadd.f32 %v426, %v691
        %v693 = vpop.f32.mrb[0].mxu0
        %694 = vmatprep.mubr.f32.mxu0 0.0
        %695 = vmatmul.mubr.f32.gmra.mrb[0].mxu0 %v493
        %v696 = vpop.f32.mrb[0].mxu0
        %v697 = vadd.f32 %v426, %v696
        %v698 = vpop.f32.mrb[0].mxu0
        %699 = vmatprep.mubr.f32.mxu0 0.0
        %700 = vmatmul.mubr.f32.gmra.mrb[0].mxu0 %v496
        %v701 = vpop.f32.mrb[0].mxu0
        %v702 = vadd.f32 %v426, %v701
        %v703 = vpop.f32.mrb[0].mxu0
        %704 = vmatprep.mubr.f32.mxu0 0.0
        %705 = vmatmul.mubr.f32.gmra.mrb[0].mxu0 %v499
        %v706 = vpop.f32.mrb[0].mxu0
        %v707 = vadd.f32 %v426, %v706
        %v708 = vpop.f32.mrb[0].mxu0
        %709 = vmatprep.mubr.f32.mxu0 0.0
        %710 = vmatmul.mubr.f32.gmra.mrb[0].mxu0 %v502
        %v711 = vpop.f32.mrb[0].mxu0
        %v712 = vadd.f32 %v426, %v711
        %v713 = vpop.f32.mrb[0].mxu0
        %714 = vmatprep.mubr.f32.mxu0 0.0
        %715 = vmatmul.mubr.f32.gmra.mrb[0].mxu0 %v505
        %v716 = vpop.f32.mrb[0].mxu0
        %v717 = vadd.f32 %v426, %v716
        %v718 = vpop.f32.mrb[0].mxu0
        %719 = vmatprep.mubr.f32.mxu0 0.0
        %720 = vmatmul.mubr.f32.gmra.mrb[0].mxu0 %v508
        %v721 = vpop.f32.mrb[0].mxu0
        %v722 = vadd.f32 %v426, %v721
        %v723 = vpop.f32.mrb[0].mxu0
        %724 = vmatprep.mubr.f32.mxu0 0.0
        %725 = vmatmul.mubr.f32.gmra.mrb[0].mxu0 %v511
        %v726 = vpop.f32.mrb[0].mxu0
        %v727 = vadd.f32 %v426, %v726
        %v728 = vpop.f32.mrb[0].mxu0
        %729 = vmatprep.mubr.f32.mxu0 0.0
        %730 = vmatmul.mubr.f32.gmra.mrb[0].mxu0 %v514
        %v731 = vpop.f32.mrb[0].mxu0
        %v732 = vadd.f32 %v426, %v731
        %v733 = vpop.f32.mrb[0].mxu0
        %734 = vmatprep.mubr.f32.mxu0 0.0
        %735 = vmatmul.mubr.f32.gmra.mrb[0].mxu0 %v517
        %v736 = vpop.f32.mrb[0].mxu0
        %v737 = vadd.f32 %v426, %v736
        %v738 = vpop.f32.mrb[0].mxu0
        %739 = vmatprep.mubr.f32.mxu0 0.0
        %740 = vmatmul.mubr.f32.gmra.mrb[0].mxu0 %v520
        %v741 = vpop.f32.mrb[0].mxu0
        %v742 = vadd.f32 %v426, %v741
        %v743 = vpop.f32.mrb[0].mxu0
        %744 = vmatprep.mubr.f32.mxu0 0.0
        %745 = vmatmul.mubr.f32.gmra.mrb[0].mxu0 %v523
        %v746 = vpop.f32.mrb[0].mxu0
        %v747 = vadd.f32 %v426, %v746
        %v748 = vpop.f32.mrb[0].mxu0
        %749 = vdwg.mxu0
        %vm750 = vcmp.gt.f32.partialorder %v592, 0.0
        %vm751 = vcmp.gt.f32.partialorder %v597, 0.0
        %vm752 = vcmp.gt.f32.partialorder %v602, 0.0
        %vm753 = vcmp.gt.f32.partialorder %v607, 0.0
        %vm754 = vcmp.gt.f32.partialorder %v612, 0.0
        %vm755 = vcmp.gt.f32.partialorder %v617, 0.0
        %vm756 = vcmp.gt.f32.partialorder %v622, 0.0
        %vm757 = vcmp.gt.f32.partialorder %v627, 0.0
        %vm758 = vcmp.gt.f32.partialorder %v632, 0.0
        %vm759 = vcmp.gt.f32.partialorder %v637, 0.0
        %vm760 = vcmp.gt.f32.partialorder %v642, 0.0
        %vm761 = vcmp.gt.f32.partialorder %v647, 0.0
        %vm762 = vcmp.gt.f32.partialorder %v652, 0.0
        %vm763 = vcmp.gt.f32.partialorder %v657, 0.0
        %vm764 = vcmp.gt.f32.partialorder %v662, 0.0
        %vm765 = vcmp.gt.f32.partialorder %v667, 0.0
        %vm766 = vcmp.gt.f32.partialorder %v672, 0.0
        %vm767 = vcmp.gt.f32.partialorder %v677, 0.0
        %vm768 = vcmp.gt.f32.partialorder %v682, 0.0
        %vm769 = vcmp.gt.f32.partialorder %v687, 0.0
        %vm770 = vcmp.gt.f32.partialorder %v692, 0.0
        %vm771 = vcmp.gt.f32.partialorder %v697, 0.0
        %vm772 = vcmp.gt.f32.partialorder %v702, 0.0
        %vm773 = vcmp.gt.f32.partialorder %v707, 0.0
        %vm774 = vcmp.gt.f32.partialorder %v712, 0.0
        %vm775 = vcmp.gt.f32.partialorder %v717, 0.0
        %vm776 = vcmp.gt.f32.partialorder %v722, 0.0
        %vm777 = vcmp.gt.f32.partialorder %v727, 0.0
        %vm778 = vcmp.gt.f32.partialorder %v732, 0.0
        %vm779 = vcmp.gt.f32.partialorder %v737, 0.0
        %vm780 = vcmp.gt.f32.partialorder %v742, 0.0
        %vm781 = vcmp.gt.f32.partialorder %v747, 0.0
        %v782 = vmul.f32 %v592, 0.01
        %v783 = vmul.f32 %v597, 0.01
        %v784 = vmul.f32 %v602, 0.01
        %v785 = vmul.f32 %v607, 0.01
        %v786 = vmul.f32 %v612, 0.01
        %v787 = vmul.f32 %v617, 0.01
        %v788 = vmul.f32 %v622, 0.01
        %v789 = vmul.f32 %v627, 0.01
        %v790 = vmul.f32 %v632, 0.01
        %v791 = vmul.f32 %v637, 0.01
        %v792 = vmul.f32 %v642, 0.01
        %v793 = vmul.f32 %v647, 0.01
        %v794 = vmul.f32 %v652, 0.01
        %v795 = vmul.f32 %v657, 0.01
        %v796 = vmul.f32 %v662, 0.01
        %v797 = vmul.f32 %v667, 0.01
        %v798 = vmul.f32 %v672, 0.01
        %v799 = vmul.f32 %v677, 0.01
        %v800 = vmul.f32 %v682, 0.01
        %v801 = vmul.f32 %v687, 0.01
        %v802 = vmul.f32 %v692, 0.01
        %v803 = vmul.f32 %v697, 0.01
        %v804 = vmul.f32 %v702, 0.01
        %v805 = vmul.f32 %v707, 0.01
        %v806 = vmul.f32 %v712, 0.01
        %v807 = vmul.f32 %v717, 0.01
        %v808 = vmul.f32 %v722, 0.01
        %v809 = vmul.f32 %v727, 0.01
        %v810 = vmul.f32 %v732, 0.01
        %v811 = vmul.f32 %v737, 0.01
        %v812 = vmul.f32 %v742, 0.01
        %v813 = vmul.f32 %v747, 0.01
        %v814 = vsel %vm750, %v592, %v782
        %v815 = vsel %vm751, %v597, %v783
        %v816 = vsel %vm752, %v602, %v784
        %v817 = vsel %vm753, %v607, %v785
        %v818 = vsel %vm754, %v612, %v786
        %v819 = vsel %vm755, %v617, %v787
        %v820 = vsel %vm756, %v622, %v788
        %v821 = vsel %vm757, %v627, %v789
        %v822 = vsel %vm758, %v632, %v790
        %v823 = vsel %vm759, %v637, %v791
        %v824 = vsel %vm760, %v642, %v792
        %v825 = vsel %vm761, %v647, %v793
        %v826 = vsel %vm762, %v652, %v794
        %v827 = vsel %vm763, %v657, %v795
        %v828 = vsel %vm764, %v662, %v796
        %v829 = vsel %vm765, %v667, %v797
        %v830 = vsel %vm766, %v672, %v798
        %v831 = vsel %vm767, %v677, %v799
        %v832 = vsel %vm768, %v682, %v800
        %v833 = vsel %vm769, %v687, %v801
        %v834 = vsel %vm770, %v692, %v802
        %v835 = vsel %vm771, %v697, %v803
        %v836 = vsel %vm772, %v702, %v804
        %v837 = vsel %vm773, %v707, %v805
        %v838 = vsel %vm774, %v712, %v806
        %v839 = vsel %vm775, %v717, %v807
        %v840 = vsel %vm776, %v722, %v808
        %v841 = vsel %vm777, %v727, %v809
        %v842 = vsel %vm778, %v732, %v810
        %v843 = vsel %vm779, %v737, %v811
        %v844 = vsel %vm780, %v742, %v812
        %v845 = vsel %vm781, %v747, %v813
        %v846 = vld [vmem:[%s3] sm:$0xff]
        %v847 = vld [vmem:[%s3 + $0x8] sm:$0xff]
        %v848 = vld [vmem:[%s3 + $0x10] sm:$0xff]
        %v849 = vld [vmem:[%s3 + $0x18] sm:$0xff]
        %v850 = vld [vmem:[%s3 + $0x20] sm:$0xff]
        %v851 = vld [vmem:[%s3 + $0x28] sm:$0xff]
        %v852 = vld [vmem:[%s3 + $0x30] sm:$0xff]
        %v853 = vld [vmem:[%s3 + $0x38] sm:$0xff]
        %v854 = vld [vmem:[%s3 + $0x40] sm:$0xff]
        %v855 = vld [vmem:[%s3 + $0x48] sm:$0xff]
        %v856 = vld [vmem:[%s3 + $0x50] sm:$0xff]
        %v857 = vld [vmem:[%s3 + $0x58] sm:$0xff]
        %v858 = vld [vmem:[%s3 + $0x60] sm:$0xff]
        %v859 = vld [vmem:[%s3 + $0x68] sm:$0xff]
        %v860 = vld [vmem:[%s3 + $0x70] sm:$0xff]
        %v861 = vld [vmem:[%s3 + $0x78] sm:$0xff]
        %v862 = vld [vmem:[%s4] sm:$0x1]
        %v864 = vlaneseq
        %v865 = vshrl.u32 %v864, 7
        %v866 = vsub.s32 0, %v865
        %v867 = vrot.slane %v862, %v866
        %869 = vmatprep.subr.mxu0 0.0
        %870 = vmatpush1.msra.mxu0 %v846
        %871 = vmatprep.subr.mxu0 0.0
        %872 = vmatpush1.msra.mxu0 %v847
        %873 = vmatprep.subr.mxu0 0.0
        %874 = vmatpush1.msra.mxu0 %v848
        %875 = vmatprep.subr.mxu0 0.0
        %876 = vmatpush1.msra.mxu0 %v849
        %877 = vmatprep.subr.mxu0 0.0
        %878 = vmatpush1.msra.mxu0 %v850
        %879 = vmatprep.subr.mxu0 0.0
        %880 = vmatpush1.msra.mxu0 %v851
        %881 = vmatprep.subr.mxu0 0.0
        %882 = vmatpush1.msra.mxu0 %v852
        %883 = vmatprep.subr.mxu0 0.0
        %884 = vmatpush1.msra.mxu0 %v853
        %885 = vmatprep.subr.mxu0 0.0
        %886 = vmatpush1.msra.mxu0 %v854
        %887 = vmatprep.subr.mxu0 0.0
        %888 = vmatpush1.msra.mxu0 %v855
        %889 = vmatprep.subr.mxu0 0.0
        %890 = vmatpush1.msra.mxu0 %v856
        %891 = vmatprep.subr.mxu0 0.0
        %892 = vmatpush1.msra.mxu0 %v857
        %893 = vmatprep.subr.mxu0 0.0
        %894 = vmatpush1.msra.mxu0 %v858
        %895 = vmatprep.subr.mxu0 0.0
        %896 = vmatpush1.msra.mxu0 %v859
        %897 = vmatprep.subr.mxu0 0.0
        %898 = vmatpush1.msra.mxu0 %v860
        %899 = vmatprep.subr.mxu0 0.0
        %900 = vmatpush1.msra.mxu0 %v861
        %901 = vmatprep.subr.mxu0 0.0
        %902 = vmatpush1.msra.mxu0 0.0
        %903 = vmatprep.subr.mxu0 0.0
        %904 = vmatpush1.msra.mxu0 0.0
        %905 = vmatprep.subr.mxu0 0.0
        %906 = vmatpush1.msra.mxu0 0.0
        %907 = vmatprep.subr.mxu0 0.0
        %908 = vmatpush1.msra.mxu0 0.0
        %909 = vmatprep.subr.mxu0 0.0
        %910 = vmatpush1.msra.mxu0 0.0
        %911 = vmatprep.subr.mxu0 0.0
        %912 = vmatpush1.msra.mxu0 0.0
        %913 = vmatprep.subr.mxu0 0.0
        %914 = vmatpush1.msra.mxu0 0.0
        %915 = vmatprep.subr.mxu0 0.0
        %916 = vmatpush1.msra.mxu0 0.0
        %917 = vmatprep.subr.mxu0 0.0
        %918 = vmatpush1.msra.mxu0 0.0
        %919 = vmatprep.subr.mxu0 0.0
        %920 = vmatpush1.msra.mxu0 0.0
        %921 = vmatprep.subr.mxu0 0.0
        %922 = vmatpush1.msra.mxu0 0.0
        %923 = vmatprep.subr.mxu0 0.0
        %924 = vmatpush1.msra.mxu0 0.0
        %925 = vmatprep.subr.mxu0 0.0
        %926 = vmatpush1.msra.mxu0 0.0
        %927 = vmatprep.subr.mxu0 0.0
        %928 = vmatpush1.msra.mxu0 0.0
        %929 = vmatprep.subr.mxu0 0.0
        %930 = vmatpush1.msra.mxu0 0.0
        %931 = vmatprep.subr.mxu0 0.0
        %932 = vmatpush1.msra.mxu0 0.0
        %933 = vmatprep.mubr.f32.mxu0 0.0
        %934 = vmatmul.mubr.f32.gmra.mrb[0].mxu0 %v814
        %v935 = vpop.f32.mrb[0].mxu0
        %v936 = vadd.f32 %v867, %v935
        %v937 = vpop.f32.mrb[0].mxu0
        %938 = vmatprep.mubr.f32.mxu0 0.0
        %939 = vmatmul.mubr.f32.gmra.mrb[0].mxu0 %v815
        %v940 = vpop.f32.mrb[0].mxu0
        %v941 = vadd.f32 %v867, %v940
        %v942 = vpop.f32.mrb[0].mxu0
        %943 = vmatprep.mubr.f32.mxu0 0.0
        %944 = vmatmul.mubr.f32.gmra.mrb[0].mxu0 %v816
        %v945 = vpop.f32.mrb[0].mxu0
        %v946 = vadd.f32 %v867, %v945
        %v947 = vpop.f32.mrb[0].mxu0
        %948 = vmatprep.mubr.f32.mxu0 0.0
        %949 = vmatmul.mubr.f32.gmra.mrb[0].mxu0 %v817
        %v950 = vpop.f32.mrb[0].mxu0
        %v951 = vadd.f32 %v867, %v950
        %v952 = vpop.f32.mrb[0].mxu0
        %953 = vmatprep.mubr.f32.mxu0 0.0
        %954 = vmatmul.mubr.f32.gmra.mrb[0].mxu0 %v818
        %v955 = vpop.f32.mrb[0].mxu0
        %v956 = vadd.f32 %v867, %v955
        %v957 = vpop.f32.mrb[0].mxu0
        %958 = vmatprep.mubr.f32.mxu0 0.0
        %959 = vmatmul.mubr.f32.gmra.mrb[0].mxu0 %v819
        %v960 = vpop.f32.mrb[0].mxu0
        %v961 = vadd.f32 %v867, %v960
        %v962 = vpop.f32.mrb[0].mxu0
        %963 = vmatprep.mubr.f32.mxu0 0.0
        %964 = vmatmul.mubr.f32.gmra.mrb[0].mxu0 %v820
        %v965 = vpop.f32.mrb[0].mxu0
        %v966 = vadd.f32 %v867, %v965
        %v967 = vpop.f32.mrb[0].mxu0
        %968 = vmatprep.mubr.f32.mxu0 0.0
        %969 = vmatmul.mubr.f32.gmra.mrb[0].mxu0 %v821
        %v970 = vpop.f32.mrb[0].mxu0
        %v971 = vadd.f32 %v867, %v970
        %v972 = vpop.f32.mrb[0].mxu0
        %973 = vmatprep.mubr.f32.mxu0 0.0
        %974 = vmatmul.mubr.f32.gmra.mrb[0].mxu0 %v822
        %v975 = vpop.f32.mrb[0].mxu0
        %v976 = vadd.f32 %v867, %v975
        %v977 = vpop.f32.mrb[0].mxu0
        %978 = vmatprep.mubr.f32.mxu0 0.0
        %979 = vmatmul.mubr.f32.gmra.mrb[0].mxu0 %v823
        %v980 = vpop.f32.mrb[0].mxu0
        %v981 = vadd.f32 %v867, %v980
        %v982 = vpop.f32.mrb[0].mxu0
        %983 = vmatprep.mubr.f32.mxu0 0.0
        %984 = vmatmul.mubr.f32.gmra.mrb[0].mxu0 %v824
        %v985 = vpop.f32.mrb[0].mxu0
        %v986 = vadd.f32 %v867, %v985
        %v987 = vpop.f32.mrb[0].mxu0
        %988 = vmatprep.mubr.f32.mxu0 0.0
        %989 = vmatmul.mubr.f32.gmra.mrb[0].mxu0 %v825
        %v990 = vpop.f32.mrb[0].mxu0
        %v991 = vadd.f32 %v867, %v990
        %v992 = vpop.f32.mrb[0].mxu0
        %993 = vmatprep.mubr.f32.mxu0 0.0
        %994 = vmatmul.mubr.f32.gmra.mrb[0].mxu0 %v826
        %v995 = vpop.f32.mrb[0].mxu0
        %v996 = vadd.f32 %v867, %v995
        %v997 = vpop.f32.mrb[0].mxu0
        %998 = vmatprep.mubr.f32.mxu0 0.0
        %999 = vmatmul.mubr.f32.gmra.mrb[0].mxu0 %v827
        %v1000 = vpop.f32.mrb[0].mxu0
        %v1001 = vadd.f32 %v867, %v1000
        %v1002 = vpop.f32.mrb[0].mxu0
        %1003 = vmatprep.mubr.f32.mxu0 0.0
        %1004 = vmatmul.mubr.f32.gmra.mrb[0].mxu0 %v828
        %v1005 = vpop.f32.mrb[0].mxu0
        %v1006 = vadd.f32 %v867, %v1005
        %v1007 = vpop.f32.mrb[0].mxu0
        %1008 = vmatprep.mubr.f32.mxu0 0.0
        %1009 = vmatmul.mubr.f32.gmra.mrb[0].mxu0 %v829
        %v1010 = vpop.f32.mrb[0].mxu0
        %v1011 = vadd.f32 %v867, %v1010
        %v1012 = vpop.f32.mrb[0].mxu0
        %1013 = vmatprep.mubr.f32.mxu0 0.0
        %1014 = vmatmul.mubr.f32.gmra.mrb[0].mxu0 %v830
        %v1015 = vpop.f32.mrb[0].mxu0
        %v1016 = vadd.f32 %v867, %v1015
        %v1017 = vpop.f32.mrb[0].mxu0
        %1018 = vmatprep.mubr.f32.mxu0 0.0
        %1019 = vmatmul.mubr.f32.gmra.mrb[0].mxu0 %v831
        %v1020 = vpop.f32.mrb[0].mxu0
        %v1021 = vadd.f32 %v867, %v1020
        %v1022 = vpop.f32.mrb[0].mxu0
        %1023 = vmatprep.mubr.f32.mxu0 0.0
        %1024 = vmatmul.mubr.f32.gmra.mrb[0].mxu0 %v832
        %v1025 = vpop.f32.mrb[0].mxu0
        %v1026 = vadd.f32 %v867, %v1025
        %v1027 = vpop.f32.mrb[0].mxu0
        %1028 = vmatprep.mubr.f32.mxu0 0.0
        %1029 = vmatmul.mubr.f32.gmra.mrb[0].mxu0 %v833
        %v1030 = vpop.f32.mrb[0].mxu0
        %v1031 = vadd.f32 %v867, %v1030
        %v1032 = vpop.f32.mrb[0].mxu0
        %1033 = vmatprep.mubr.f32.mxu0 0.0
        %1034 = vmatmul.mubr.f32.gmra.mrb[0].mxu0 %v834
        %v1035 = vpop.f32.mrb[0].mxu0
        %v1036 = vadd.f32 %v867, %v1035
        %v1037 = vpop.f32.mrb[0].mxu0
        %1038 = vmatprep.mubr.f32.mxu0 0.0
        %1039 = vmatmul.mubr.f32.gmra.mrb[0].mxu0 %v835
        %v1040 = vpop.f32.mrb[0].mxu0
        %v1041 = vadd.f32 %v867, %v1040
        %v1042 = vpop.f32.mrb[0].mxu0
        %1043 = vmatprep.mubr.f32.mxu0 0.0
        %1044 = vmatmul.mubr.f32.gmra.mrb[0].mxu0 %v836
        %v1045 = vpop.f32.mrb[0].mxu0
        %v1046 = vadd.f32 %v867, %v1045
        %v1047 = vpop.f32.mrb[0].mxu0
        %1048 = vmatprep.mubr.f32.mxu0 0.0
        %1049 = vmatmul.mubr.f32.gmra.mrb[0].mxu0 %v837
        %v1050 = vpop.f32.mrb[0].mxu0
        %v1051 = vadd.f32 %v867, %v1050
        %v1052 = vpop.f32.mrb[0].mxu0
        %1053 = vmatprep.mubr.f32.mxu0 0.0
        %1054 = vmatmul.mubr.f32.gmra.mrb[0].mxu0 %v838
        %v1055 = vpop.f32.mrb[0].mxu0
        %v1056 = vadd.f32 %v867, %v1055
        %v1057 = vpop.f32.mrb[0].mxu0
        %1058 = vmatprep.mubr.f32.mxu0 0.0
        %1059 = vmatmul.mubr.f32.gmra.mrb[0].mxu0 %v839
        %v1060 = vpop.f32.mrb[0].mxu0
        %v1061 = vadd.f32 %v867, %v1060
        %v1062 = vpop.f32.mrb[0].mxu0
        %1063 = vmatprep.mubr.f32.mxu0 0.0
        %1064 = vmatmul.mubr.f32.gmra.mrb[0].mxu0 %v840
        %v1065 = vpop.f32.mrb[0].mxu0
        %v1066 = vadd.f32 %v867, %v1065
        %v1067 = vpop.f32.mrb[0].mxu0
        %1068 = vmatprep.mubr.f32.mxu0 0.0
        %1069 = vmatmul.mubr.f32.gmra.mrb[0].mxu0 %v841
        %v1070 = vpop.f32.mrb[0].mxu0
        %v1071 = vadd.f32 %v867, %v1070
        %v1072 = vpop.f32.mrb[0].mxu0
        %1073 = vmatprep.mubr.f32.mxu0 0.0
        %1074 = vmatmul.mubr.f32.gmra.mrb[0].mxu0 %v842
        %v1075 = vpop.f32.mrb[0].mxu0
        %v1076 = vadd.f32 %v867, %v1075
        %v1077 = vpop.f32.mrb[0].mxu0
        %1078 = vmatprep.mubr.f32.mxu0 0.0
        %1079 = vmatmul.mubr.f32.gmra.mrb[0].mxu0 %v843
        %v1080 = vpop.f32.mrb[0].mxu0
        %v1081 = vadd.f32 %v867, %v1080
        %v1082 = vpop.f32.mrb[0].mxu0
        %1083 = vmatprep.mubr.f32.mxu0 0.0
        %1084 = vmatmul.mubr.f32.gmra.mrb[0].mxu0 %v844
        %v1085 = vpop.f32.mrb[0].mxu0
        %v1086 = vadd.f32 %v867, %v1085
        %v1087 = vpop.f32.mrb[0].mxu0
        %1088 = vmatprep.mubr.f32.mxu0 0.0
        %1089 = vmatmul.mubr.f32.gmra.mrb[0].mxu0 %v845
        %v1090 = vpop.f32.mrb[0].mxu0
        %v1091 = vadd.f32 %v867, %v1090
        %v1092 = vpop.f32.mrb[0].mxu0
        %1093 = vdwg.mxu0
        %vm1094 = vcmp.gt.f32.partialorder %v936, 0.0
        %vm1095 = vcmp.gt.f32.partialorder %v941, 0.0
        %vm1096 = vcmp.gt.f32.partialorder %v946, 0.0
        %vm1097 = vcmp.gt.f32.partialorder %v951, 0.0
        %vm1098 = vcmp.gt.f32.partialorder %v956, 0.0
        %vm1099 = vcmp.gt.f32.partialorder %v961, 0.0
        %vm1100 = vcmp.gt.f32.partialorder %v966, 0.0
        %vm1101 = vcmp.gt.f32.partialorder %v971, 0.0
        %vm1102 = vcmp.gt.f32.partialorder %v976, 0.0
        %vm1103 = vcmp.gt.f32.partialorder %v981, 0.0
        %vm1104 = vcmp.gt.f32.partialorder %v986, 0.0
        %vm1105 = vcmp.gt.f32.partialorder %v991, 0.0
        %vm1106 = vcmp.gt.f32.partialorder %v996, 0.0
        %vm1107 = vcmp.gt.f32.partialorder %v1001, 0.0
        %vm1108 = vcmp.gt.f32.partialorder %v1006, 0.0
        %vm1109 = vcmp.gt.f32.partialorder %v1011, 0.0
        %vm1110 = vcmp.gt.f32.partialorder %v1016, 0.0
        %vm1111 = vcmp.gt.f32.partialorder %v1021, 0.0
        %vm1112 = vcmp.gt.f32.partialorder %v1026, 0.0
        %vm1113 = vcmp.gt.f32.partialorder %v1031, 0.0
        %vm1114 = vcmp.gt.f32.partialorder %v1036, 0.0
        %vm1115 = vcmp.gt.f32.partialorder %v1041, 0.0
        %vm1116 = vcmp.gt.f32.partialorder %v1046, 0.0
        %vm1117 = vcmp.gt.f32.partialorder %v1051, 0.0
        %vm1118 = vcmp.gt.f32.partialorder %v1056, 0.0
        %vm1119 = vcmp.gt.f32.partialorder %v1061, 0.0
        %vm1120 = vcmp.gt.f32.partialorder %v1066, 0.0
        %vm1121 = vcmp.gt.f32.partialorder %v1071, 0.0
        %vm1122 = vcmp.gt.f32.partialorder %v1076, 0.0
        %vm1123 = vcmp.gt.f32.partialorder %v1081, 0.0
        %vm1124 = vcmp.gt.f32.partialorder %v1086, 0.0
        %vm1125 = vcmp.gt.f32.partialorder %v1091, 0.0
        %v1126 = vmul.f32 %v936, 0.01
        %v1127 = vmul.f32 %v941, 0.01
        %v1128 = vmul.f32 %v946, 0.01
        %v1129 = vmul.f32 %v951, 0.01
        %v1130 = vmul.f32 %v956, 0.01
        %v1131 = vmul.f32 %v961, 0.01
        %v1132 = vmul.f32 %v966, 0.01
        %v1133 = vmul.f32 %v971, 0.01
        %v1134 = vmul.f32 %v976, 0.01
        %v1135 = vmul.f32 %v981, 0.01
        %v1136 = vmul.f32 %v986, 0.01
        %v1137 = vmul.f32 %v991, 0.01
        %v1138 = vmul.f32 %v996, 0.01
        %v1139 = vmul.f32 %v1001, 0.01
        %v1140 = vmul.f32 %v1006, 0.01
        %v1141 = vmul.f32 %v1011, 0.01
        %v1142 = vmul.f32 %v1016, 0.01
        %v1143 = vmul.f32 %v1021, 0.01
        %v1144 = vmul.f32 %v1026, 0.01
        %v1145 = vmul.f32 %v1031, 0.01
        %v1146 = vmul.f32 %v1036, 0.01
        %v1147 = vmul.f32 %v1041, 0.01
        %v1148 = vmul.f32 %v1046, 0.01
        %v1149 = vmul.f32 %v1051, 0.01
        %v1150 = vmul.f32 %v1056, 0.01
        %v1151 = vmul.f32 %v1061, 0.01
        %v1152 = vmul.f32 %v1066, 0.01
        %v1153 = vmul.f32 %v1071, 0.01
        %v1154 = vmul.f32 %v1076, 0.01
        %v1155 = vmul.f32 %v1081, 0.01
        %v1156 = vmul.f32 %v1086, 0.01
        %v1157 = vmul.f32 %v1091, 0.01
        %v1158 = vsel %vm1094, %v936, %v1126
        %v1159 = vsel %vm1095, %v941, %v1127
        %v1160 = vsel %vm1096, %v946, %v1128
        %v1161 = vsel %vm1097, %v951, %v1129
        %v1162 = vsel %vm1098, %v956, %v1130
        %v1163 = vsel %vm1099, %v961, %v1131
        %v1164 = vsel %vm1100, %v966, %v1132
        %v1165 = vsel %vm1101, %v971, %v1133
        %v1166 = vsel %vm1102, %v976, %v1134
        %v1167 = vsel %vm1103, %v981, %v1135
        %v1168 = vsel %vm1104, %v986, %v1136
        %v1169 = vsel %vm1105, %v991, %v1137
        %v1170 = vsel %vm1106, %v996, %v1138
        %v1171 = vsel %vm1107, %v1001, %v1139
        %v1172 = vsel %vm1108, %v1006, %v1140
        %v1173 = vsel %vm1109, %v1011, %v1141
        %v1174 = vsel %vm1110, %v1016, %v1142
        %v1175 = vsel %vm1111, %v1021, %v1143
        %v1176 = vsel %vm1112, %v1026, %v1144
        %v1177 = vsel %vm1113, %v1031, %v1145
        %v1178 = vsel %vm1114, %v1036, %v1146
        %v1179 = vsel %vm1115, %v1041, %v1147
        %v1180 = vsel %vm1116, %v1046, %v1148
        %v1181 = vsel %vm1117, %v1051, %v1149
        %v1182 = vsel %vm1118, %v1056, %v1150
        %v1183 = vsel %vm1119, %v1061, %v1151
        %v1184 = vsel %vm1120, %v1066, %v1152
        %v1185 = vsel %vm1121, %v1071, %v1153
        %v1186 = vsel %vm1122, %v1076, %v1154
        %v1187 = vsel %vm1123, %v1081, %v1155
        %v1188 = vsel %vm1124, %v1086, %v1156
        %v1189 = vsel %vm1125, %v1091, %v1157
        %v1190 = vld [vmem:[%s5] sm:$0xff]
        %v1191 = vld [vmem:[%s5 + $0x8] sm:$0xff]
        %v1192 = vld [vmem:[%s5 + $0x10] sm:$0xff]
        %v1193 = vld [vmem:[%s5 + $0x18] sm:$0xff]
        %v1194 = vld [vmem:[%s5 + $0x20] sm:$0xff]
        %v1195 = vld [vmem:[%s5 + $0x28] sm:$0xff]
        %v1196 = vld [vmem:[%s5 + $0x30] sm:$0xff]
        %v1197 = vld [vmem:[%s5 + $0x38] sm:$0xff]
        %v1198 = vld [vmem:[%s5 + $0x40] sm:$0xff]
        %v1199 = vld [vmem:[%s5 + $0x48] sm:$0xff]
        %v1200 = vld [vmem:[%s5 + $0x50] sm:$0xff]
        %v1201 = vld [vmem:[%s5 + $0x58] sm:$0xff]
        %v1202 = vld [vmem:[%s5 + $0x60] sm:$0xff]
        %v1203 = vld [vmem:[%s5 + $0x68] sm:$0xff]
        %v1204 = vld [vmem:[%s5 + $0x70] sm:$0xff]
        %v1205 = vld [vmem:[%s5 + $0x78] sm:$0xff]
        %v1206 = vld [vmem:[%s6] sm:$0x1]
        %v1208 = vlaneseq
        %v1209 = vshrl.u32 %v1208, 7
        %v1210 = vsub.s32 0, %v1209
        %v1211 = vrot.slane %v1206, %v1210
        %1213 = vmatprep.subr.mxu0 0.0
        %1214 = vmatpush1.msra.mxu0 %v1190
        %1215 = vmatprep.subr.mxu0 0.0
        %1216 = vmatpush1.msra.mxu0 %v1191
        %1217 = vmatprep.subr.mxu0 0.0
        %1218 = vmatpush1.msra.mxu0 %v1192
        %1219 = vmatprep.subr.mxu0 0.0
        %1220 = vmatpush1.msra.mxu0 %v1193
        %1221 = vmatprep.subr.mxu0 0.0
        %1222 = vmatpush1.msra.mxu0 %v1194
        %1223 = vmatprep.subr.mxu0 0.0
        %1224 = vmatpush1.msra.mxu0 %v1195
        %1225 = vmatprep.subr.mxu0 0.0
        %1226 = vmatpush1.msra.mxu0 %v1196
        %1227 = vmatprep.subr.mxu0 0.0
        %1228 = vmatpush1.msra.mxu0 %v1197
        %1229 = vmatprep.subr.mxu0 0.0
        %1230 = vmatpush1.msra.mxu0 %v1198
        %1231 = vmatprep.subr.mxu0 0.0
        %1232 = vmatpush1.msra.mxu0 %v1199
        %1233 = vmatprep.subr.mxu0 0.0
        %1234 = vmatpush1.msra.mxu0 %v1200
        %1235 = vmatprep.subr.mxu0 0.0
        %1236 = vmatpush1.msra.mxu0 %v1201
        %1237 = vmatprep.subr.mxu0 0.0
        %1238 = vmatpush1.msra.mxu0 %v1202
        %1239 = vmatprep.subr.mxu0 0.0
        %1240 = vmatpush1.msra.mxu0 %v1203
        %1241 = vmatprep.subr.mxu0 0.0
        %1242 = vmatpush1.msra.mxu0 %v1204
        %1243 = vmatprep.subr.mxu0 0.0
        %1244 = vmatpush1.msra.mxu0 %v1205
        %1245 = vmatprep.subr.mxu0 0.0
        %1246 = vmatpush1.msra.mxu0 0.0
        %1247 = vmatprep.subr.mxu0 0.0
        %1248 = vmatpush1.msra.mxu0 0.0
        %1249 = vmatprep.subr.mxu0 0.0
        %1250 = vmatpush1.msra.mxu0 0.0
        %1251 = vmatprep.subr.mxu0 0.0
        %1252 = vmatpush1.msra.mxu0 0.0
        %1253 = vmatprep.subr.mxu0 0.0
        %1254 = vmatpush1.msra.mxu0 0.0
        %1255 = vmatprep.subr.mxu0 0.0
        %1256 = vmatpush1.msra.mxu0 0.0
        %1257 = vmatprep.subr.mxu0 0.0
        %1258 = vmatpush1.msra.mxu0 0.0
        %1259 = vmatprep.subr.mxu0 0.0
        %1260 = vmatpush1.msra.mxu0 0.0
        %1261 = vmatprep.subr.mxu0 0.0
        %1262 = vmatpush1.msra.mxu0 0.0
        %1263 = vmatprep.subr.mxu0 0.0
        %1264 = vmatpush1.msra.mxu0 0.0
        %1265 = vmatprep.subr.mxu0 0.0
        %1266 = vmatpush1.msra.mxu0 0.0
        %1267 = vmatprep.subr.mxu0 0.0
        %1268 = vmatpush1.msra.mxu0 0.0
        %1269 = vmatprep.subr.mxu0 0.0
        %1270 = vmatpush1.msra.mxu0 0.0
        %1271 = vmatprep.subr.mxu0 0.0
        %1272 = vmatpush1.msra.mxu0 0.0
        %1273 = vmatprep.subr.mxu0 0.0
        %1274 = vmatpush1.msra.mxu0 0.0
        %1275 = vmatprep.subr.mxu0 0.0
        %1276 = vmatpush1.msra.mxu0 0.0
        %1277 = vmatprep.mubr.f32.mxu0 0.0
        %1278 = vmatmul.mubr.f32.gmra.mrb[0].mxu0 %v1158
        %v1279 = vpop.f32.mrb[0].mxu0
        %v1280 = vadd.f32 %v1211, %v1279
        %v1281 = vpop.f32.mrb[0].mxu0
        %1282 = vmatprep.mubr.f32.mxu0 0.0
        %1283 = vmatmul.mubr.f32.gmra.mrb[0].mxu0 %v1159
        %v1284 = vpop.f32.mrb[0].mxu0
        %v1285 = vadd.f32 %v1211, %v1284
        %v1286 = vpop.f32.mrb[0].mxu0
        %1287 = vmatprep.mubr.f32.mxu0 0.0
        %1288 = vmatmul.mubr.f32.gmra.mrb[0].mxu0 %v1160
        %v1289 = vpop.f32.mrb[0].mxu0
        %v1290 = vadd.f32 %v1211, %v1289
        %v1291 = vpop.f32.mrb[0].mxu0
        %1292 = vmatprep.mubr.f32.mxu0 0.0
        %1293 = vmatmul.mubr.f32.gmra.mrb[0].mxu0 %v1161
        %v1294 = vpop.f32.mrb[0].mxu0
        %v1295 = vadd.f32 %v1211, %v1294
        %v1296 = vpop.f32.mrb[0].mxu0
        %1297 = vmatprep.mubr.f32.mxu0 0.0
        %1298 = vmatmul.mubr.f32.gmra.mrb[0].mxu0 %v1162
        %v1299 = vpop.f32.mrb[0].mxu0
        %v1300 = vadd.f32 %v1211, %v1299
        %v1301 = vpop.f32.mrb[0].mxu0
        %1302 = vmatprep.mubr.f32.mxu0 0.0
        %1303 = vmatmul.mubr.f32.gmra.mrb[0].mxu0 %v1163
        %v1304 = vpop.f32.mrb[0].mxu0
        %v1305 = vadd.f32 %v1211, %v1304
        %v1306 = vpop.f32.mrb[0].mxu0
        %1307 = vmatprep.mubr.f32.mxu0 0.0
        %1308 = vmatmul.mubr.f32.gmra.mrb[0].mxu0 %v1164
        %v1309 = vpop.f32.mrb[0].mxu0
        %v1310 = vadd.f32 %v1211, %v1309
        %v1311 = vpop.f32.mrb[0].mxu0
        %1312 = vmatprep.mubr.f32.mxu0 0.0
        %1313 = vmatmul.mubr.f32.gmra.mrb[0].mxu0 %v1165
        %v1314 = vpop.f32.mrb[0].mxu0
        %v1315 = vadd.f32 %v1211, %v1314
        %v1316 = vpop.f32.mrb[0].mxu0
        %1317 = vmatprep.mubr.f32.mxu0 0.0
        %1318 = vmatmul.mubr.f32.gmra.mrb[0].mxu0 %v1166
        %v1319 = vpop.f32.mrb[0].mxu0
        %v1320 = vadd.f32 %v1211, %v1319
        %v1321 = vpop.f32.mrb[0].mxu0
        %1322 = vmatprep.mubr.f32.mxu0 0.0
        %1323 = vmatmul.mubr.f32.gmra.mrb[0].mxu0 %v1167
        %v1324 = vpop.f32.mrb[0].mxu0
        %v1325 = vadd.f32 %v1211, %v1324
        %v1326 = vpop.f32.mrb[0].mxu0
        %1327 = vmatprep.mubr.f32.mxu0 0.0
        %1328 = vmatmul.mubr.f32.gmra.mrb[0].mxu0 %v1168
        %v1329 = vpop.f32.mrb[0].mxu0
        %v1330 = vadd.f32 %v1211, %v1329
        %v1331 = vpop.f32.mrb[0].mxu0
        %1332 = vmatprep.mubr.f32.mxu0 0.0
        %1333 = vmatmul.mubr.f32.gmra.mrb[0].mxu0 %v1169
        %v1334 = vpop.f32.mrb[0].mxu0
        %v1335 = vadd.f32 %v1211, %v1334
        %v1336 = vpop.f32.mrb[0].mxu0
        %1337 = vmatprep.mubr.f32.mxu0 0.0
        %1338 = vmatmul.mubr.f32.gmra.mrb[0].mxu0 %v1170
        %v1339 = vpop.f32.mrb[0].mxu0
        %v1340 = vadd.f32 %v1211, %v1339
        %v1341 = vpop.f32.mrb[0].mxu0
        %1342 = vmatprep.mubr.f32.mxu0 0.0
        %1343 = vmatmul.mubr.f32.gmra.mrb[0].mxu0 %v1171
        %v1344 = vpop.f32.mrb[0].mxu0
        %v1345 = vadd.f32 %v1211, %v1344
        %v1346 = vpop.f32.mrb[0].mxu0
        %1347 = vmatprep.mubr.f32.mxu0 0.0
        %1348 = vmatmul.mubr.f32.gmra.mrb[0].mxu0 %v1172
        %v1349 = vpop.f32.mrb[0].mxu0
        %v1350 = vadd.f32 %v1211, %v1349
        %v1351 = vpop.f32.mrb[0].mxu0
        %1352 = vmatprep.mubr.f32.mxu0 0.0
        %1353 = vmatmul.mubr.f32.gmra.mrb[0].mxu0 %v1173
        %v1354 = vpop.f32.mrb[0].mxu0
        %v1355 = vadd.f32 %v1211, %v1354
        %v1356 = vpop.f32.mrb[0].mxu0
        %1357 = vmatprep.mubr.f32.mxu0 0.0
        %1358 = vmatmul.mubr.f32.gmra.mrb[0].mxu0 %v1174
        %v1359 = vpop.f32.mrb[0].mxu0
        %v1360 = vadd.f32 %v1211, %v1359
        %v1361 = vpop.f32.mrb[0].mxu0
        %1362 = vmatprep.mubr.f32.mxu0 0.0
        %1363 = vmatmul.mubr.f32.gmra.mrb[0].mxu0 %v1175
        %v1364 = vpop.f32.mrb[0].mxu0
        %v1365 = vadd.f32 %v1211, %v1364
        %v1366 = vpop.f32.mrb[0].mxu0
        %1367 = vmatprep.mubr.f32.mxu0 0.0
        %1368 = vmatmul.mubr.f32.gmra.mrb[0].mxu0 %v1176
        %v1369 = vpop.f32.mrb[0].mxu0
        %v1370 = vadd.f32 %v1211, %v1369
        %v1371 = vpop.f32.mrb[0].mxu0
        %1372 = vmatprep.mubr.f32.mxu0 0.0
        %1373 = vmatmul.mubr.f32.gmra.mrb[0].mxu0 %v1177
        %v1374 = vpop.f32.mrb[0].mxu0
        %v1375 = vadd.f32 %v1211, %v1374
        %v1376 = vpop.f32.mrb[0].mxu0
        %1377 = vmatprep.mubr.f32.mxu0 0.0
        %1378 = vmatmul.mubr.f32.gmra.mrb[0].mxu0 %v1178
        %v1379 = vpop.f32.mrb[0].mxu0
        %v1380 = vadd.f32 %v1211, %v1379
        %v1381 = vpop.f32.mrb[0].mxu0
        %1382 = vmatprep.mubr.f32.mxu0 0.0
        %1383 = vmatmul.mubr.f32.gmra.mrb[0].mxu0 %v1179
        %v1384 = vpop.f32.mrb[0].mxu0
        %v1385 = vadd.f32 %v1211, %v1384
        %v1386 = vpop.f32.mrb[0].mxu0
        %1387 = vmatprep.mubr.f32.mxu0 0.0
        %1388 = vmatmul.mubr.f32.gmra.mrb[0].mxu0 %v1180
        %v1389 = vpop.f32.mrb[0].mxu0
        %v1390 = vadd.f32 %v1211, %v1389
        %v1391 = vpop.f32.mrb[0].mxu0
        %1392 = vmatprep.mubr.f32.mxu0 0.0
        %1393 = vmatmul.mubr.f32.gmra.mrb[0].mxu0 %v1181
        %v1394 = vpop.f32.mrb[0].mxu0
        %v1395 = vadd.f32 %v1211, %v1394
        %v1396 = vpop.f32.mrb[0].mxu0
        %1397 = vmatprep.mubr.f32.mxu0 0.0
        %1398 = vmatmul.mubr.f32.gmra.mrb[0].mxu0 %v1182
        %v1399 = vpop.f32.mrb[0].mxu0
        %v1400 = vadd.f32 %v1211, %v1399
        %v1401 = vpop.f32.mrb[0].mxu0
        %1402 = vmatprep.mubr.f32.mxu0 0.0
        %1403 = vmatmul.mubr.f32.gmra.mrb[0].mxu0 %v1183
        %v1404 = vpop.f32.mrb[0].mxu0
        %v1405 = vadd.f32 %v1211, %v1404
        %v1406 = vpop.f32.mrb[0].mxu0
        %1407 = vmatprep.mubr.f32.mxu0 0.0
        %1408 = vmatmul.mubr.f32.gmra.mrb[0].mxu0 %v1184
        %v1409 = vpop.f32.mrb[0].mxu0
        %v1410 = vadd.f32 %v1211, %v1409
        %v1411 = vpop.f32.mrb[0].mxu0
        %1412 = vmatprep.mubr.f32.mxu0 0.0
        %1413 = vmatmul.mubr.f32.gmra.mrb[0].mxu0 %v1185
        %v1414 = vpop.f32.mrb[0].mxu0
        %v1415 = vadd.f32 %v1211, %v1414
        %v1416 = vpop.f32.mrb[0].mxu0
        %1417 = vmatprep.mubr.f32.mxu0 0.0
        %1418 = vmatmul.mubr.f32.gmra.mrb[0].mxu0 %v1186
        %v1419 = vpop.f32.mrb[0].mxu0
        %v1420 = vadd.f32 %v1211, %v1419
        %v1421 = vpop.f32.mrb[0].mxu0
        %1422 = vmatprep.mubr.f32.mxu0 0.0
        %1423 = vmatmul.mubr.f32.gmra.mrb[0].mxu0 %v1187
        %v1424 = vpop.f32.mrb[0].mxu0
        %v1425 = vadd.f32 %v1211, %v1424
        %v1426 = vpop.f32.mrb[0].mxu0
        %1427 = vmatprep.mubr.f32.mxu0 0.0
        %1428 = vmatmul.mubr.f32.gmra.mrb[0].mxu0 %v1188
        %v1429 = vpop.f32.mrb[0].mxu0
        %v1430 = vadd.f32 %v1211, %v1429
        %v1431 = vpop.f32.mrb[0].mxu0
        %1432 = vmatprep.mubr.f32.mxu0 0.0
        %1433 = vmatmul.mubr.f32.gmra.mrb[0].mxu0 %v1189
        %v1434 = vpop.f32.mrb[0].mxu0
        %v1435 = vadd.f32 %v1211, %v1434
        %v1436 = vpop.f32.mrb[0].mxu0
        %1437 = vdwg.mxu0
        %vm1438 = vcmp.gt.f32.partialorder %v1280, 0.0
        %vm1439 = vcmp.gt.f32.partialorder %v1285, 0.0
        %vm1440 = vcmp.gt.f32.partialorder %v1290, 0.0
        %vm1441 = vcmp.gt.f32.partialorder %v1295, 0.0
        %vm1442 = vcmp.gt.f32.partialorder %v1300, 0.0
        %vm1443 = vcmp.gt.f32.partialorder %v1305, 0.0
        %vm1444 = vcmp.gt.f32.partialorder %v1310, 0.0
        %vm1445 = vcmp.gt.f32.partialorder %v1315, 0.0
        %vm1446 = vcmp.gt.f32.partialorder %v1320, 0.0
        %vm1447 = vcmp.gt.f32.partialorder %v1325, 0.0
        %vm1448 = vcmp.gt.f32.partialorder %v1330, 0.0
        %vm1449 = vcmp.gt.f32.partialorder %v1335, 0.0
        %vm1450 = vcmp.gt.f32.partialorder %v1340, 0.0
        %vm1451 = vcmp.gt.f32.partialorder %v1345, 0.0
        %vm1452 = vcmp.gt.f32.partialorder %v1350, 0.0
        %vm1453 = vcmp.gt.f32.partialorder %v1355, 0.0
        %vm1454 = vcmp.gt.f32.partialorder %v1360, 0.0
        %vm1455 = vcmp.gt.f32.partialorder %v1365, 0.0
        %vm1456 = vcmp.gt.f32.partialorder %v1370, 0.0
        %vm1457 = vcmp.gt.f32.partialorder %v1375, 0.0
        %vm1458 = vcmp.gt.f32.partialorder %v1380, 0.0
        %vm1459 = vcmp.gt.f32.partialorder %v1385, 0.0
        %vm1460 = vcmp.gt.f32.partialorder %v1390, 0.0
        %vm1461 = vcmp.gt.f32.partialorder %v1395, 0.0
        %vm1462 = vcmp.gt.f32.partialorder %v1400, 0.0
        %vm1463 = vcmp.gt.f32.partialorder %v1405, 0.0
        %vm1464 = vcmp.gt.f32.partialorder %v1410, 0.0
        %vm1465 = vcmp.gt.f32.partialorder %v1415, 0.0
        %vm1466 = vcmp.gt.f32.partialorder %v1420, 0.0
        %vm1467 = vcmp.gt.f32.partialorder %v1425, 0.0
        %vm1468 = vcmp.gt.f32.partialorder %v1430, 0.0
        %vm1469 = vcmp.gt.f32.partialorder %v1435, 0.0
        %v1470 = vmul.f32 %v1280, 0.01
        %v1471 = vmul.f32 %v1285, 0.01
        %v1472 = vmul.f32 %v1290, 0.01
        %v1473 = vmul.f32 %v1295, 0.01
        %v1474 = vmul.f32 %v1300, 0.01
        %v1475 = vmul.f32 %v1305, 0.01
        %v1476 = vmul.f32 %v1310, 0.01
        %v1477 = vmul.f32 %v1315, 0.01
        %v1478 = vmul.f32 %v1320, 0.01
        %v1479 = vmul.f32 %v1325, 0.01
        %v1480 = vmul.f32 %v1330, 0.01
        %v1481 = vmul.f32 %v1335, 0.01
        %v1482 = vmul.f32 %v1340, 0.01
        %v1483 = vmul.f32 %v1345, 0.01
        %v1484 = vmul.f32 %v1350, 0.01
        %v1485 = vmul.f32 %v1355, 0.01
        %v1486 = vmul.f32 %v1360, 0.01
        %v1487 = vmul.f32 %v1365, 0.01
        %v1488 = vmul.f32 %v1370, 0.01
        %v1489 = vmul.f32 %v1375, 0.01
        %v1490 = vmul.f32 %v1380, 0.01
        %v1491 = vmul.f32 %v1385, 0.01
        %v1492 = vmul.f32 %v1390, 0.01
        %v1493 = vmul.f32 %v1395, 0.01
        %v1494 = vmul.f32 %v1400, 0.01
        %v1495 = vmul.f32 %v1405, 0.01
        %v1496 = vmul.f32 %v1410, 0.01
        %v1497 = vmul.f32 %v1415, 0.01
        %v1498 = vmul.f32 %v1420, 0.01
        %v1499 = vmul.f32 %v1425, 0.01
        %v1500 = vmul.f32 %v1430, 0.01
        %v1501 = vmul.f32 %v1435, 0.01
        %v1502 = vsel %vm1438, %v1280, %v1470
        %v1503 = vsel %vm1439, %v1285, %v1471
        %v1504 = vsel %vm1440, %v1290, %v1472
        %v1505 = vsel %vm1441, %v1295, %v1473
        %v1506 = vsel %vm1442, %v1300, %v1474
        %v1507 = vsel %vm1443, %v1305, %v1475
        %v1508 = vsel %vm1444, %v1310, %v1476
        %v1509 = vsel %vm1445, %v1315, %v1477
        %v1510 = vsel %vm1446, %v1320, %v1478
        %v1511 = vsel %vm1447, %v1325, %v1479
        %v1512 = vsel %vm1448, %v1330, %v1480
        %v1513 = vsel %vm1449, %v1335, %v1481
        %v1514 = vsel %vm1450, %v1340, %v1482
        %v1515 = vsel %vm1451, %v1345, %v1483
        %v1516 = vsel %vm1452, %v1350, %v1484
        %v1517 = vsel %vm1453, %v1355, %v1485
        %v1518 = vsel %vm1454, %v1360, %v1486
        %v1519 = vsel %vm1455, %v1365, %v1487
        %v1520 = vsel %vm1456, %v1370, %v1488
        %v1521 = vsel %vm1457, %v1375, %v1489
        %v1522 = vsel %vm1458, %v1380, %v1490
        %v1523 = vsel %vm1459, %v1385, %v1491
        %v1524 = vsel %vm1460, %v1390, %v1492
        %v1525 = vsel %vm1461, %v1395, %v1493
        %v1526 = vsel %vm1462, %v1400, %v1494
        %v1527 = vsel %vm1463, %v1405, %v1495
        %v1528 = vsel %vm1464, %v1410, %v1496
        %v1529 = vsel %vm1465, %v1415, %v1497
        %v1530 = vsel %vm1466, %v1420, %v1498
        %v1531 = vsel %vm1467, %v1425, %v1499
        %v1532 = vsel %vm1468, %v1430, %v1500
        %v1533 = vsel %vm1469, %v1435, %v1501
        %v1534 = vld [vmem:[%s7] sm:$0xff]
        %v1535 = vld [vmem:[%s7 + $0x8] sm:$0xff]
        %v1536 = vld [vmem:[%s7 + $0x10] sm:$0xff]
        %v1537 = vld [vmem:[%s7 + $0x18] sm:$0xff]
        %v1538 = vld [vmem:[%s7 + $0x20] sm:$0xff]
        %v1539 = vld [vmem:[%s7 + $0x28] sm:$0xff]
        %v1540 = vld [vmem:[%s7 + $0x30] sm:$0xff]
        %v1541 = vld [vmem:[%s7 + $0x38] sm:$0xff]
        %v1542 = vld [vmem:[%s7 + $0x40] sm:$0xff]
        %v1543 = vld [vmem:[%s7 + $0x48] sm:$0xff]
        %v1544 = vld [vmem:[%s7 + $0x50] sm:$0xff]
        %v1545 = vld [vmem:[%s7 + $0x58] sm:$0xff]
        %v1546 = vld [vmem:[%s7 + $0x60] sm:$0xff]
        %v1547 = vld [vmem:[%s7 + $0x68] sm:$0xff]
        %v1548 = vld [vmem:[%s7 + $0x70] sm:$0xff]
        %v1549 = vld [vmem:[%s7 + $0x78] sm:$0xff]
        %v1550 = vld [vmem:[%s8] sm:$0x1]
        %v1552 = vlaneseq
        %v1553 = vshrl.u32 %v1552, 7
        %v1554 = vsub.s32 0, %v1553
        %v1555 = vrot.slane %v1550, %v1554
        %1557 = vmatprep.subr.mxu0 0.0
        %1558 = vmatpush1.msra.mxu0 %v1534
        %1559 = vmatprep.subr.mxu0 0.0
        %1560 = vmatpush1.msra.mxu0 %v1535
        %1561 = vmatprep.subr.mxu0 0.0
        %1562 = vmatpush1.msra.mxu0 %v1536
        %1563 = vmatprep.subr.mxu0 0.0
        %1564 = vmatpush1.msra.mxu0 %v1537
        %1565 = vmatprep.subr.mxu0 0.0
        %1566 = vmatpush1.msra.mxu0 %v1538
        %1567 = vmatprep.subr.mxu0 0.0
        %1568 = vmatpush1.msra.mxu0 %v1539
        %1569 = vmatprep.subr.mxu0 0.0
        %1570 = vmatpush1.msra.mxu0 %v1540
        %1571 = vmatprep.subr.mxu0 0.0
        %1572 = vmatpush1.msra.mxu0 %v1541
        %1573 = vmatprep.subr.mxu0 0.0
        %1574 = vmatpush1.msra.mxu0 %v1542
        %1575 = vmatprep.subr.mxu0 0.0
        %1576 = vmatpush1.msra.mxu0 %v1543
        %1577 = vmatprep.subr.mxu0 0.0
        %1578 = vmatpush1.msra.mxu0 %v1544
        %1579 = vmatprep.subr.mxu0 0.0
        %1580 = vmatpush1.msra.mxu0 %v1545
        %1581 = vmatprep.subr.mxu0 0.0
        %1582 = vmatpush1.msra.mxu0 %v1546
        %1583 = vmatprep.subr.mxu0 0.0
        %1584 = vmatpush1.msra.mxu0 %v1547
        %1585 = vmatprep.subr.mxu0 0.0
        %1586 = vmatpush1.msra.mxu0 %v1548
        %1587 = vmatprep.subr.mxu0 0.0
        %1588 = vmatpush1.msra.mxu0 %v1549
        %1589 = vmatprep.subr.mxu0 0.0
        %1590 = vmatpush1.msra.mxu0 0.0
        %1591 = vmatprep.subr.mxu0 0.0
        %1592 = vmatpush1.msra.mxu0 0.0
        %1593 = vmatprep.subr.mxu0 0.0
        %1594 = vmatpush1.msra.mxu0 0.0
        %1595 = vmatprep.subr.mxu0 0.0
        %1596 = vmatpush1.msra.mxu0 0.0
        %1597 = vmatprep.subr.mxu0 0.0
        %1598 = vmatpush1.msra.mxu0 0.0
        %1599 = vmatprep.subr.mxu0 0.0
        %1600 = vmatpush1.msra.mxu0 0.0
        %1601 = vmatprep.subr.mxu0 0.0
        %1602 = vmatpush1.msra.mxu0 0.0
        %1603 = vmatprep.subr.mxu0 0.0
        %1604 = vmatpush1.msra.mxu0 0.0
        %1605 = vmatprep.subr.mxu0 0.0
        %1606 = vmatpush1.msra.mxu0 0.0
        %1607 = vmatprep.subr.mxu0 0.0
        %1608 = vmatpush1.msra.mxu0 0.0
        %1609 = vmatprep.subr.mxu0 0.0
        %1610 = vmatpush1.msra.mxu0 0.0
        %1611 = vmatprep.subr.mxu0 0.0
        %1612 = vmatpush1.msra.mxu0 0.0
        %1613 = vmatprep.subr.mxu0 0.0
        %1614 = vmatpush1.msra.mxu0 0.0
        %1615 = vmatprep.subr.mxu0 0.0
        %1616 = vmatpush1.msra.mxu0 0.0
        %1617 = vmatprep.subr.mxu0 0.0
        %1618 = vmatpush1.msra.mxu0 0.0
        %1619 = vmatprep.subr.mxu0 0.0
        %1620 = vmatpush1.msra.mxu0 0.0
        %1621 = vmatprep.mubr.f32.mxu0 0.0
        %1622 = vmatmul.mubr.f32.gmra.mrb[0].mxu0 %v1502
        %v1623 = vpop.f32.mrb[0].mxu0
        %v1624 = vadd.f32 %v1555, %v1623
        %v1625 = vpop.f32.mrb[0].mxu0
        %1626 = vmatprep.mubr.f32.mxu0 0.0
        %1627 = vmatmul.mubr.f32.gmra.mrb[0].mxu0 %v1503
        %v1628 = vpop.f32.mrb[0].mxu0
        %v1629 = vadd.f32 %v1555, %v1628
        %v1630 = vpop.f32.mrb[0].mxu0
        %1631 = vmatprep.mubr.f32.mxu0 0.0
        %1632 = vmatmul.mubr.f32.gmra.mrb[0].mxu0 %v1504
        %v1633 = vpop.f32.mrb[0].mxu0
        %v1634 = vadd.f32 %v1555, %v1633
        %v1635 = vpop.f32.mrb[0].mxu0
        %1636 = vmatprep.mubr.f32.mxu0 0.0
        %1637 = vmatmul.mubr.f32.gmra.mrb[0].mxu0 %v1505
        %v1638 = vpop.f32.mrb[0].mxu0
        %v1639 = vadd.f32 %v1555, %v1638
        %v1640 = vpop.f32.mrb[0].mxu0
        %1641 = vmatprep.mubr.f32.mxu0 0.0
        %1642 = vmatmul.mubr.f32.gmra.mrb[0].mxu0 %v1506
        %v1643 = vpop.f32.mrb[0].mxu0
        %v1644 = vadd.f32 %v1555, %v1643
        %v1645 = vpop.f32.mrb[0].mxu0
        %1646 = vmatprep.mubr.f32.mxu0 0.0
        %1647 = vmatmul.mubr.f32.gmra.mrb[0].mxu0 %v1507
        %v1648 = vpop.f32.mrb[0].mxu0
        %v1649 = vadd.f32 %v1555, %v1648
        %v1650 = vpop.f32.mrb[0].mxu0
        %1651 = vmatprep.mubr.f32.mxu0 0.0
        %1652 = vmatmul.mubr.f32.gmra.mrb[0].mxu0 %v1508
        %v1653 = vpop.f32.mrb[0].mxu0
        %v1654 = vadd.f32 %v1555, %v1653
        %v1655 = vpop.f32.mrb[0].mxu0
        %1656 = vmatprep.mubr.f32.mxu0 0.0
        %1657 = vmatmul.mubr.f32.gmra.mrb[0].mxu0 %v1509
        %v1658 = vpop.f32.mrb[0].mxu0
        %v1659 = vadd.f32 %v1555, %v1658
        %v1660 = vpop.f32.mrb[0].mxu0
        %1661 = vmatprep.mubr.f32.mxu0 0.0
        %1662 = vmatmul.mubr.f32.gmra.mrb[0].mxu0 %v1510
        %v1663 = vpop.f32.mrb[0].mxu0
        %v1664 = vadd.f32 %v1555, %v1663
        %v1665 = vpop.f32.mrb[0].mxu0
        %1666 = vmatprep.mubr.f32.mxu0 0.0
        %1667 = vmatmul.mubr.f32.gmra.mrb[0].mxu0 %v1511
        %v1668 = vpop.f32.mrb[0].mxu0
        %v1669 = vadd.f32 %v1555, %v1668
        %v1670 = vpop.f32.mrb[0].mxu0
        %1671 = vmatprep.mubr.f32.mxu0 0.0
        %1672 = vmatmul.mubr.f32.gmra.mrb[0].mxu0 %v1512
        %v1673 = vpop.f32.mrb[0].mxu0
        %v1674 = vadd.f32 %v1555, %v1673
        %v1675 = vpop.f32.mrb[0].mxu0
        %1676 = vmatprep.mubr.f32.mxu0 0.0
        %1677 = vmatmul.mubr.f32.gmra.mrb[0].mxu0 %v1513
        %v1678 = vpop.f32.mrb[0].mxu0
        %v1679 = vadd.f32 %v1555, %v1678
        %v1680 = vpop.f32.mrb[0].mxu0
        %1681 = vmatprep.mubr.f32.mxu0 0.0
        %1682 = vmatmul.mubr.f32.gmra.mrb[0].mxu0 %v1514
        %v1683 = vpop.f32.mrb[0].mxu0
        %v1684 = vadd.f32 %v1555, %v1683
        %v1685 = vpop.f32.mrb[0].mxu0
        %1686 = vmatprep.mubr.f32.mxu0 0.0
        %1687 = vmatmul.mubr.f32.gmra.mrb[0].mxu0 %v1515
        %v1688 = vpop.f32.mrb[0].mxu0
        %v1689 = vadd.f32 %v1555, %v1688
        %v1690 = vpop.f32.mrb[0].mxu0
        %1691 = vmatprep.mubr.f32.mxu0 0.0
        %1692 = vmatmul.mubr.f32.gmra.mrb[0].mxu0 %v1516
        %v1693 = vpop.f32.mrb[0].mxu0
        %v1694 = vadd.f32 %v1555, %v1693
        %v1695 = vpop.f32.mrb[0].mxu0
        %1696 = vmatprep.mubr.f32.mxu0 0.0
        %1697 = vmatmul.mubr.f32.gmra.mrb[0].mxu0 %v1517
        %v1698 = vpop.f32.mrb[0].mxu0
        %v1699 = vadd.f32 %v1555, %v1698
        %v1700 = vpop.f32.mrb[0].mxu0
        %1701 = vmatprep.mubr.f32.mxu0 0.0
        %1702 = vmatmul.mubr.f32.gmra.mrb[0].mxu0 %v1518
        %v1703 = vpop.f32.mrb[0].mxu0
        %v1704 = vadd.f32 %v1555, %v1703
        %v1705 = vpop.f32.mrb[0].mxu0
        %1706 = vmatprep.mubr.f32.mxu0 0.0
        %1707 = vmatmul.mubr.f32.gmra.mrb[0].mxu0 %v1519
        %v1708 = vpop.f32.mrb[0].mxu0
        %v1709 = vadd.f32 %v1555, %v1708
        %v1710 = vpop.f32.mrb[0].mxu0
        %1711 = vmatprep.mubr.f32.mxu0 0.0
        %1712 = vmatmul.mubr.f32.gmra.mrb[0].mxu0 %v1520
        %v1713 = vpop.f32.mrb[0].mxu0
        %v1714 = vadd.f32 %v1555, %v1713
        %v1715 = vpop.f32.mrb[0].mxu0
        %1716 = vmatprep.mubr.f32.mxu0 0.0
        %1717 = vmatmul.mubr.f32.gmra.mrb[0].mxu0 %v1521
        %v1718 = vpop.f32.mrb[0].mxu0
        %v1719 = vadd.f32 %v1555, %v1718
        %v1720 = vpop.f32.mrb[0].mxu0
        %1721 = vmatprep.mubr.f32.mxu0 0.0
        %1722 = vmatmul.mubr.f32.gmra.mrb[0].mxu0 %v1522
        %v1723 = vpop.f32.mrb[0].mxu0
        %v1724 = vadd.f32 %v1555, %v1723
        %v1725 = vpop.f32.mrb[0].mxu0
        %1726 = vmatprep.mubr.f32.mxu0 0.0
        %1727 = vmatmul.mubr.f32.gmra.mrb[0].mxu0 %v1523
        %v1728 = vpop.f32.mrb[0].mxu0
        %v1729 = vadd.f32 %v1555, %v1728
        %v1730 = vpop.f32.mrb[0].mxu0
        %1731 = vmatprep.mubr.f32.mxu0 0.0
        %1732 = vmatmul.mubr.f32.gmra.mrb[0].mxu0 %v1524
        %v1733 = vpop.f32.mrb[0].mxu0
        %v1734 = vadd.f32 %v1555, %v1733
        %v1735 = vpop.f32.mrb[0].mxu0
        %1736 = vmatprep.mubr.f32.mxu0 0.0
        %1737 = vmatmul.mubr.f32.gmra.mrb[0].mxu0 %v1525
        %v1738 = vpop.f32.mrb[0].mxu0
        %v1739 = vadd.f32 %v1555, %v1738
        %v1740 = vpop.f32.mrb[0].mxu0
        %1741 = vmatprep.mubr.f32.mxu0 0.0
        %1742 = vmatmul.mubr.f32.gmra.mrb[0].mxu0 %v1526
        %v1743 = vpop.f32.mrb[0].mxu0
        %v1744 = vadd.f32 %v1555, %v1743
        %v1745 = vpop.f32.mrb[0].mxu0
        %1746 = vmatprep.mubr.f32.mxu0 0.0
        %1747 = vmatmul.mubr.f32.gmra.mrb[0].mxu0 %v1527
        %v1748 = vpop.f32.mrb[0].mxu0
        %v1749 = vadd.f32 %v1555, %v1748
        %v1750 = vpop.f32.mrb[0].mxu0
        %1751 = vmatprep.mubr.f32.mxu0 0.0
        %1752 = vmatmul.mubr.f32.gmra.mrb[0].mxu0 %v1528
        %v1753 = vpop.f32.mrb[0].mxu0
        %v1754 = vadd.f32 %v1555, %v1753
        %v1755 = vpop.f32.mrb[0].mxu0
        %1756 = vmatprep.mubr.f32.mxu0 0.0
        %1757 = vmatmul.mubr.f32.gmra.mrb[0].mxu0 %v1529
        %v1758 = vpop.f32.mrb[0].mxu0
        %v1759 = vadd.f32 %v1555, %v1758
        %v1760 = vpop.f32.mrb[0].mxu0
        %1761 = vmatprep.mubr.f32.mxu0 0.0
        %1762 = vmatmul.mubr.f32.gmra.mrb[0].mxu0 %v1530
        %v1763 = vpop.f32.mrb[0].mxu0
        %v1764 = vadd.f32 %v1555, %v1763
        %v1765 = vpop.f32.mrb[0].mxu0
        %1766 = vmatprep.mubr.f32.mxu0 0.0
        %1767 = vmatmul.mubr.f32.gmra.mrb[0].mxu0 %v1531
        %v1768 = vpop.f32.mrb[0].mxu0
        %v1769 = vadd.f32 %v1555, %v1768
        %v1770 = vpop.f32.mrb[0].mxu0
        %1771 = vmatprep.mubr.f32.mxu0 0.0
        %1772 = vmatmul.mubr.f32.gmra.mrb[0].mxu0 %v1532
        %v1773 = vpop.f32.mrb[0].mxu0
        %v1774 = vadd.f32 %v1555, %v1773
        %v1775 = vpop.f32.mrb[0].mxu0
        %1776 = vmatprep.mubr.f32.mxu0 0.0
        %1777 = vmatmul.mubr.f32.gmra.mrb[0].mxu0 %v1533
        %v1778 = vpop.f32.mrb[0].mxu0
        %v1779 = vadd.f32 %v1555, %v1778
        %v1780 = vpop.f32.mrb[0].mxu0
        %1781 = vdwg.mxu0
        %vm1782 = vcmp.gt.f32.partialorder %v1624, 0.0
        %vm1783 = vcmp.gt.f32.partialorder %v1629, 0.0
        %vm1784 = vcmp.gt.f32.partialorder %v1634, 0.0
        %vm1785 = vcmp.gt.f32.partialorder %v1639, 0.0
        %vm1786 = vcmp.gt.f32.partialorder %v1644, 0.0
        %vm1787 = vcmp.gt.f32.partialorder %v1649, 0.0
        %vm1788 = vcmp.gt.f32.partialorder %v1654, 0.0
        %vm1789 = vcmp.gt.f32.partialorder %v1659, 0.0
        %vm1790 = vcmp.gt.f32.partialorder %v1664, 0.0
        %vm1791 = vcmp.gt.f32.partialorder %v1669, 0.0
        %vm1792 = vcmp.gt.f32.partialorder %v1674, 0.0
        %vm1793 = vcmp.gt.f32.partialorder %v1679, 0.0
        %vm1794 = vcmp.gt.f32.partialorder %v1684, 0.0
        %vm1795 = vcmp.gt.f32.partialorder %v1689, 0.0
        %vm1796 = vcmp.gt.f32.partialorder %v1694, 0.0
        %vm1797 = vcmp.gt.f32.partialorder %v1699, 0.0
        %vm1798 = vcmp.gt.f32.partialorder %v1704, 0.0
        %vm1799 = vcmp.gt.f32.partialorder %v1709, 0.0
        %vm1800 = vcmp.gt.f32.partialorder %v1714, 0.0
        %vm1801 = vcmp.gt.f32.partialorder %v1719, 0.0
        %vm1802 = vcmp.gt.f32.partialorder %v1724, 0.0
        %vm1803 = vcmp.gt.f32.partialorder %v1729, 0.0
        %vm1804 = vcmp.gt.f32.partialorder %v1734, 0.0
        %vm1805 = vcmp.gt.f32.partialorder %v1739, 0.0
        %vm1806 = vcmp.gt.f32.partialorder %v1744, 0.0
        %vm1807 = vcmp.gt.f32.partialorder %v1749, 0.0
        %vm1808 = vcmp.gt.f32.partialorder %v1754, 0.0
        %vm1809 = vcmp.gt.f32.partialorder %v1759, 0.0
        %vm1810 = vcmp.gt.f32.partialorder %v1764, 0.0
        %vm1811 = vcmp.gt.f32.partialorder %v1769, 0.0
        %vm1812 = vcmp.gt.f32.partialorder %v1774, 0.0
        %vm1813 = vcmp.gt.f32.partialorder %v1779, 0.0
        %v1814 = vmul.f32 %v1624, 0.01
        %v1815 = vmul.f32 %v1629, 0.01
        %v1816 = vmul.f32 %v1634, 0.01
        %v1817 = vmul.f32 %v1639, 0.01
        %v1818 = vmul.f32 %v1644, 0.01
        %v1819 = vmul.f32 %v1649, 0.01
        %v1820 = vmul.f32 %v1654, 0.01
        %v1821 = vmul.f32 %v1659, 0.01
        %v1822 = vmul.f32 %v1664, 0.01
        %v1823 = vmul.f32 %v1669, 0.01
        %v1824 = vmul.f32 %v1674, 0.01
        %v1825 = vmul.f32 %v1679, 0.01
        %v1826 = vmul.f32 %v1684, 0.01
        %v1827 = vmul.f32 %v1689, 0.01
        %v1828 = vmul.f32 %v1694, 0.01
        %v1829 = vmul.f32 %v1699, 0.01
        %v1830 = vmul.f32 %v1704, 0.01
        %v1831 = vmul.f32 %v1709, 0.01
        %v1832 = vmul.f32 %v1714, 0.01
        %v1833 = vmul.f32 %v1719, 0.01
        %v1834 = vmul.f32 %v1724, 0.01
        %v1835 = vmul.f32 %v1729, 0.01
        %v1836 = vmul.f32 %v1734, 0.01
        %v1837 = vmul.f32 %v1739, 0.01
        %v1838 = vmul.f32 %v1744, 0.01
        %v1839 = vmul.f32 %v1749, 0.01
        %v1840 = vmul.f32 %v1754, 0.01
        %v1841 = vmul.f32 %v1759, 0.01
        %v1842 = vmul.f32 %v1764, 0.01
        %v1843 = vmul.f32 %v1769, 0.01
        %v1844 = vmul.f32 %v1774, 0.01
        %v1845 = vmul.f32 %v1779, 0.01
        %v1846 = vsel %vm1782, %v1624, %v1814
        %v1847 = vsel %vm1783, %v1629, %v1815
        %v1848 = vsel %vm1784, %v1634, %v1816
        %v1849 = vsel %vm1785, %v1639, %v1817
        %v1850 = vsel %vm1786, %v1644, %v1818
        %v1851 = vsel %vm1787, %v1649, %v1819
        %v1852 = vsel %vm1788, %v1654, %v1820
        %v1853 = vsel %vm1789, %v1659, %v1821
        %v1854 = vsel %vm1790, %v1664, %v1822
        %v1855 = vsel %vm1791, %v1669, %v1823
        %v1856 = vsel %vm1792, %v1674, %v1824
        %v1857 = vsel %vm1793, %v1679, %v1825
        %v1858 = vsel %vm1794, %v1684, %v1826
        %v1859 = vsel %vm1795, %v1689, %v1827
        %v1860 = vsel %vm1796, %v1694, %v1828
        %v1861 = vsel %vm1797, %v1699, %v1829
        %v1862 = vsel %vm1798, %v1704, %v1830
        %v1863 = vsel %vm1799, %v1709, %v1831
        %v1864 = vsel %vm1800, %v1714, %v1832
        %v1865 = vsel %vm1801, %v1719, %v1833
        %v1866 = vsel %vm1802, %v1724, %v1834
        %v1867 = vsel %vm1803, %v1729, %v1835
        %v1868 = vsel %vm1804, %v1734, %v1836
        %v1869 = vsel %vm1805, %v1739, %v1837
        %v1870 = vsel %vm1806, %v1744, %v1838
        %v1871 = vsel %vm1807, %v1749, %v1839
        %v1872 = vsel %vm1808, %v1754, %v1840
        %v1873 = vsel %vm1809, %v1759, %v1841
        %v1874 = vsel %vm1810, %v1764, %v1842
        %v1875 = vsel %vm1811, %v1769, %v1843
        %v1876 = vsel %vm1812, %v1774, %v1844
        %v1877 = vsel %vm1813, %v1779, %v1845
        %v1878 = vld [vmem:[%s9] sm:$0xff]
        %v1879 = vld [vmem:[%s9 + $0x8] sm:$0xff]
        %v1880 = vld [vmem:[%s9 + $0x10] sm:$0xff]
        %v1881 = vld [vmem:[%s9 + $0x18] sm:$0xff]
        %v1882 = vld [vmem:[%s9 + $0x20] sm:$0xff]
        %v1883 = vld [vmem:[%s9 + $0x28] sm:$0xff]
        %v1884 = vld [vmem:[%s9 + $0x30] sm:$0xff]
        %v1885 = vld [vmem:[%s9 + $0x38] sm:$0xff]
        %v1886 = vld [vmem:[%s10] sm:$0x1]
        %v1888 = vlaneseq
        %v1889 = vshrl.u32 %v1888, 7
        %v1890 = vsub.s32 0, %v1889
        %v1891 = vrot.slane %v1886, %v1890
        %vm1893 = vcmask 523264
        %v1895 = vsel %vm1893, %v1846, 0
        %v1898 = vsel %vm1893, %v1847, 0
        %v1901 = vsel %vm1893, %v1848, 0
        %v1904 = vsel %vm1893, %v1849, 0
        %v1907 = vsel %vm1893, %v1850, 0
        %v1910 = vsel %vm1893, %v1851, 0
        %v1913 = vsel %vm1893, %v1852, 0
        %v1916 = vsel %vm1893, %v1853, 0
        %v1919 = vsel %vm1893, %v1854, 0
        %v1922 = vsel %vm1893, %v1855, 0
        %v1925 = vsel %vm1893, %v1856, 0
        %v1928 = vsel %vm1893, %v1857, 0
        %v1931 = vsel %vm1893, %v1858, 0
        %v1934 = vsel %vm1893, %v1859, 0
        %v1937 = vsel %vm1893, %v1860, 0
        %v1940 = vsel %vm1893, %v1861, 0
        %v1943 = vsel %vm1893, %v1862, 0
        %v1946 = vsel %vm1893, %v1863, 0
        %v1949 = vsel %vm1893, %v1864, 0
        %v1952 = vsel %vm1893, %v1865, 0
        %v1955 = vsel %vm1893, %v1866, 0
        %v1958 = vsel %vm1893, %v1867, 0
        %v1961 = vsel %vm1893, %v1868, 0
        %v1964 = vsel %vm1893, %v1869, 0
        %v1967 = vsel %vm1893, %v1870, 0
        %v1970 = vsel %vm1893, %v1871, 0
        %v1973 = vsel %vm1893, %v1872, 0
        %v1976 = vsel %vm1893, %v1873, 0
        %v1979 = vsel %vm1893, %v1874, 0
        %v1982 = vsel %vm1893, %v1875, 0
        %v1985 = vsel %vm1893, %v1876, 0
        %v1988 = vsel %vm1893, %v1877, 0
        %1990 = vmatprep.subr.mxu0 0.0
        %1991 = vmatpush1.msra.mxu0 %v1878
        %1992 = vmatprep.subr.mxu0 0.0
        %1993 = vmatpush1.msra.mxu0 %v1879
        %1994 = vmatprep.subr.mxu0 0.0
        %1995 = vmatpush1.msra.mxu0 %v1880
        %1996 = vmatprep.subr.mxu0 0.0
        %1997 = vmatpush1.msra.mxu0 %v1881
        %1998 = vmatprep.subr.mxu0 0.0
        %1999 = vmatpush1.msra.mxu0 %v1882
        %2000 = vmatprep.subr.mxu0 0.0
        %2001 = vmatpush1.msra.mxu0 %v1883
        %2002 = vmatprep.subr.mxu0 0.0
        %2003 = vmatpush1.msra.mxu0 %v1884
        %2004 = vmatprep.subr.mxu0 0.0
        %2005 = vmatpush1.msra.mxu0 %v1885
        %2006 = vmatprep.subr.mxu0 0.0
        %2007 = vmatpush1.msra.mxu0 0.0
        %2008 = vmatprep.subr.mxu0 0.0
        %2009 = vmatpush1.msra.mxu0 0.0
        %2010 = vmatprep.subr.mxu0 0.0
        %2011 = vmatpush1.msra.mxu0 0.0
        %2012 = vmatprep.subr.mxu0 0.0
        %2013 = vmatpush1.msra.mxu0 0.0
        %2014 = vmatprep.subr.mxu0 0.0
        %2015 = vmatpush1.msra.mxu0 0.0
        %2016 = vmatprep.subr.mxu0 0.0
        %2017 = vmatpush1.msra.mxu0 0.0
        %2018 = vmatprep.subr.mxu0 0.0
        %2019 = vmatpush1.msra.mxu0 0.0
        %2020 = vmatprep.subr.mxu0 0.0
        %2021 = vmatpush1.msra.mxu0 0.0
        %2022 = vmatprep.subr.mxu0 0.0
        %2023 = vmatpush1.msra.mxu0 0.0
        %2024 = vmatprep.subr.mxu0 0.0
        %2025 = vmatpush1.msra.mxu0 0.0
        %2026 = vmatprep.subr.mxu0 0.0
        %2027 = vmatpush1.msra.mxu0 0.0
        %2028 = vmatprep.subr.mxu0 0.0
        %2029 = vmatpush1.msra.mxu0 0.0
        %2030 = vmatprep.subr.mxu0 0.0
        %2031 = vmatpush1.msra.mxu0 0.0
        %2032 = vmatprep.subr.mxu0 0.0
        %2033 = vmatpush1.msra.mxu0 0.0
        %2034 = vmatprep.subr.mxu0 0.0
        %2035 = vmatpush1.msra.mxu0 0.0
        %2036 = vmatprep.subr.mxu0 0.0
        %2037 = vmatpush1.msra.mxu0 0.0
        %2038 = vmatprep.subr.mxu0 0.0
        %2039 = vmatpush1.msra.mxu0 0.0
        %2040 = vmatprep.subr.mxu0 0.0
        %2041 = vmatpush1.msra.mxu0 0.0
        %2042 = vmatprep.subr.mxu0 0.0
        %2043 = vmatpush1.msra.mxu0 0.0
        %2044 = vmatprep.subr.mxu0 0.0
        %2045 = vmatpush1.msra.mxu0 0.0
        %2046 = vmatprep.subr.mxu0 0.0
        %2047 = vmatpush1.msra.mxu0 0.0
        %2048 = vmatprep.subr.mxu0 0.0
        %2049 = vmatpush1.msra.mxu0 0.0
        %2050 = vmatprep.subr.mxu0 0.0
        %2051 = vmatpush1.msra.mxu0 0.0
        %2052 = vmatprep.subr.mxu0 0.0
        %2053 = vmatpush1.msra.mxu0 0.0
        %2054 = vmatprep.mubr.f32.mxu0 0.0
        %2055 = vmatmul.mubr.f32.gmra.mrb[0].mxu0 %v1895
        %v2056 = vpop.f32.mrb[0].mxu0
        %v2057 = vadd.f32 %v1891, %v2056
        %v2058 = vpop.f32.mrb[0].mxu0
        %2059 = vmatprep.mubr.f32.mxu0 0.0
        %2060 = vmatmul.mubr.f32.gmra.mrb[0].mxu0 %v1898
        %v2061 = vpop.f32.mrb[0].mxu0
        %v2062 = vadd.f32 %v1891, %v2061
        %v2063 = vpop.f32.mrb[0].mxu0
        %2064 = vmatprep.mubr.f32.mxu0 0.0
        %2065 = vmatmul.mubr.f32.gmra.mrb[0].mxu0 %v1901
        %v2066 = vpop.f32.mrb[0].mxu0
        %v2067 = vadd.f32 %v1891, %v2066
        %v2068 = vpop.f32.mrb[0].mxu0
        %2069 = vmatprep.mubr.f32.mxu0 0.0
        %2070 = vmatmul.mubr.f32.gmra.mrb[0].mxu0 %v1904
        %v2071 = vpop.f32.mrb[0].mxu0
        %v2072 = vadd.f32 %v1891, %v2071
        %v2073 = vpop.f32.mrb[0].mxu0
        %2074 = vmatprep.mubr.f32.mxu0 0.0
        %2075 = vmatmul.mubr.f32.gmra.mrb[0].mxu0 %v1907
        %v2076 = vpop.f32.mrb[0].mxu0
        %v2077 = vadd.f32 %v1891, %v2076
        %v2078 = vpop.f32.mrb[0].mxu0
        %2079 = vmatprep.mubr.f32.mxu0 0.0
        %2080 = vmatmul.mubr.f32.gmra.mrb[0].mxu0 %v1910
        %v2081 = vpop.f32.mrb[0].mxu0
        %v2082 = vadd.f32 %v1891, %v2081
        %v2083 = vpop.f32.mrb[0].mxu0
        %2084 = vmatprep.mubr.f32.mxu0 0.0
        %2085 = vmatmul.mubr.f32.gmra.mrb[0].mxu0 %v1913
        %v2086 = vpop.f32.mrb[0].mxu0
        %v2087 = vadd.f32 %v1891, %v2086
        %v2088 = vpop.f32.mrb[0].mxu0
        %2089 = vmatprep.mubr.f32.mxu0 0.0
        %2090 = vmatmul.mubr.f32.gmra.mrb[0].mxu0 %v1916
        %v2091 = vpop.f32.mrb[0].mxu0
        %v2092 = vadd.f32 %v1891, %v2091
        %v2093 = vpop.f32.mrb[0].mxu0
        %2094 = vmatprep.mubr.f32.mxu0 0.0
        %2095 = vmatmul.mubr.f32.gmra.mrb[0].mxu0 %v1919
        %v2096 = vpop.f32.mrb[0].mxu0
        %v2097 = vadd.f32 %v1891, %v2096
        %v2098 = vpop.f32.mrb[0].mxu0
        %2099 = vmatprep.mubr.f32.mxu0 0.0
        %2100 = vmatmul.mubr.f32.gmra.mrb[0].mxu0 %v1922
        %v2101 = vpop.f32.mrb[0].mxu0
        %v2102 = vadd.f32 %v1891, %v2101
        %v2103 = vpop.f32.mrb[0].mxu0
        %2104 = vmatprep.mubr.f32.mxu0 0.0
        %2105 = vmatmul.mubr.f32.gmra.mrb[0].mxu0 %v1925
        %v2106 = vpop.f32.mrb[0].mxu0
        %v2107 = vadd.f32 %v1891, %v2106
        %v2108 = vpop.f32.mrb[0].mxu0
        %2109 = vmatprep.mubr.f32.mxu0 0.0
        %2110 = vmatmul.mubr.f32.gmra.mrb[0].mxu0 %v1928
        %v2111 = vpop.f32.mrb[0].mxu0
        %v2112 = vadd.f32 %v1891, %v2111
        %v2113 = vpop.f32.mrb[0].mxu0
        %2114 = vmatprep.mubr.f32.mxu0 0.0
        %2115 = vmatmul.mubr.f32.gmra.mrb[0].mxu0 %v1931
        %v2116 = vpop.f32.mrb[0].mxu0
        %v2117 = vadd.f32 %v1891, %v2116
        %v2118 = vpop.f32.mrb[0].mxu0
        %2119 = vmatprep.mubr.f32.mxu0 0.0
        %2120 = vmatmul.mubr.f32.gmra.mrb[0].mxu0 %v1934
        %v2121 = vpop.f32.mrb[0].mxu0
        %v2122 = vadd.f32 %v1891, %v2121
        %v2123 = vpop.f32.mrb[0].mxu0
        %2124 = vmatprep.mubr.f32.mxu0 0.0
        %2125 = vmatmul.mubr.f32.gmra.mrb[0].mxu0 %v1937
        %v2126 = vpop.f32.mrb[0].mxu0
        %v2127 = vadd.f32 %v1891, %v2126
        %v2128 = vpop.f32.mrb[0].mxu0
        %2129 = vmatprep.mubr.f32.mxu0 0.0
        %2130 = vmatmul.mubr.f32.gmra.mrb[0].mxu0 %v1940
        %v2131 = vpop.f32.mrb[0].mxu0
        %v2132 = vadd.f32 %v1891, %v2131
        %v2133 = vpop.f32.mrb[0].mxu0
        %2134 = vmatprep.mubr.f32.mxu0 0.0
        %2135 = vmatmul.mubr.f32.gmra.mrb[0].mxu0 %v1943
        %v2136 = vpop.f32.mrb[0].mxu0
        %v2137 = vadd.f32 %v1891, %v2136
        %v2138 = vpop.f32.mrb[0].mxu0
        %2139 = vmatprep.mubr.f32.mxu0 0.0
        %2140 = vmatmul.mubr.f32.gmra.mrb[0].mxu0 %v1946
        %v2141 = vpop.f32.mrb[0].mxu0
        %v2142 = vadd.f32 %v1891, %v2141
        %v2143 = vpop.f32.mrb[0].mxu0
        %2144 = vmatprep.mubr.f32.mxu0 0.0
        %2145 = vmatmul.mubr.f32.gmra.mrb[0].mxu0 %v1949
        %v2146 = vpop.f32.mrb[0].mxu0
        %v2147 = vadd.f32 %v1891, %v2146
        %v2148 = vpop.f32.mrb[0].mxu0
        %2149 = vmatprep.mubr.f32.mxu0 0.0
        %2150 = vmatmul.mubr.f32.gmra.mrb[0].mxu0 %v1952
        %v2151 = vpop.f32.mrb[0].mxu0
        %v2152 = vadd.f32 %v1891, %v2151
        %v2153 = vpop.f32.mrb[0].mxu0
        %2154 = vmatprep.mubr.f32.mxu0 0.0
        %2155 = vmatmul.mubr.f32.gmra.mrb[0].mxu0 %v1955
        %v2156 = vpop.f32.mrb[0].mxu0
        %v2157 = vadd.f32 %v1891, %v2156
        %v2158 = vpop.f32.mrb[0].mxu0
        %2159 = vmatprep.mubr.f32.mxu0 0.0
        %2160 = vmatmul.mubr.f32.gmra.mrb[0].mxu0 %v1958
        %v2161 = vpop.f32.mrb[0].mxu0
        %v2162 = vadd.f32 %v1891, %v2161
        %v2163 = vpop.f32.mrb[0].mxu0
        %2164 = vmatprep.mubr.f32.mxu0 0.0
        %2165 = vmatmul.mubr.f32.gmra.mrb[0].mxu0 %v1961
        %v2166 = vpop.f32.mrb[0].mxu0
        %v2167 = vadd.f32 %v1891, %v2166
        %v2168 = vpop.f32.mrb[0].mxu0
        %2169 = vmatprep.mubr.f32.mxu0 0.0
        %2170 = vmatmul.mubr.f32.gmra.mrb[0].mxu0 %v1964
        %v2171 = vpop.f32.mrb[0].mxu0
        %v2172 = vadd.f32 %v1891, %v2171
        %v2173 = vpop.f32.mrb[0].mxu0
        %2174 = vmatprep.mubr.f32.mxu0 0.0
        %2175 = vmatmul.mubr.f32.gmra.mrb[0].mxu0 %v1967
        %v2176 = vpop.f32.mrb[0].mxu0
        %v2177 = vadd.f32 %v1891, %v2176
        %v2178 = vpop.f32.mrb[0].mxu0
        %2179 = vmatprep.mubr.f32.mxu0 0.0
        %2180 = vmatmul.mubr.f32.gmra.mrb[0].mxu0 %v1970
        %v2181 = vpop.f32.mrb[0].mxu0
        %v2182 = vadd.f32 %v1891, %v2181
        %v2183 = vpop.f32.mrb[0].mxu0
        %2184 = vmatprep.mubr.f32.mxu0 0.0
        %2185 = vmatmul.mubr.f32.gmra.mrb[0].mxu0 %v1973
        %v2186 = vpop.f32.mrb[0].mxu0
        %v2187 = vadd.f32 %v1891, %v2186
        %v2188 = vpop.f32.mrb[0].mxu0
        %2189 = vmatprep.mubr.f32.mxu0 0.0
        %2190 = vmatmul.mubr.f32.gmra.mrb[0].mxu0 %v1976
        %v2191 = vpop.f32.mrb[0].mxu0
        %v2192 = vadd.f32 %v1891, %v2191
        %v2193 = vpop.f32.mrb[0].mxu0
        %2194 = vmatprep.mubr.f32.mxu0 0.0
        %2195 = vmatmul.mubr.f32.gmra.mrb[0].mxu0 %v1979
        %v2196 = vpop.f32.mrb[0].mxu0
        %v2197 = vadd.f32 %v1891, %v2196
        %v2198 = vpop.f32.mrb[0].mxu0
        %2199 = vmatprep.mubr.f32.mxu0 0.0
        %2200 = vmatmul.mubr.f32.gmra.mrb[0].mxu0 %v1982
        %v2201 = vpop.f32.mrb[0].mxu0
        %v2202 = vadd.f32 %v1891, %v2201
        %v2203 = vpop.f32.mrb[0].mxu0
        %2204 = vmatprep.mubr.f32.mxu0 0.0
        %2205 = vmatmul.mubr.f32.gmra.mrb[0].mxu0 %v1985
        %v2206 = vpop.f32.mrb[0].mxu0
        %v2207 = vadd.f32 %v1891, %v2206
        %v2208 = vpop.f32.mrb[0].mxu0
        %2209 = vmatprep.mubr.f32.mxu0 0.0
        %2210 = vmatmul.mubr.f32.gmra.mrb[0].mxu0 %v1988
        %v2211 = vpop.f32.mrb[0].mxu0
        %v2212 = vadd.f32 %v1891, %v2211
        %v2213 = vpop.f32.mrb[0].mxu0
        %2214 = vdwg.mxu0
        %2215 = vst [vmem:[%s380] sm:$0xff] %v2057
        %2216 = vst [vmem:[%s380 + $0x8] sm:$0xff] %v2062
        %2217 = vst [vmem:[%s380 + $0x10] sm:$0xff] %v2067
        %2218 = vst [vmem:[%s380 + $0x18] sm:$0xff] %v2072
        %2219 = vst [vmem:[%s380 + $0x20] sm:$0xff] %v2077
        %2220 = vst [vmem:[%s380 + $0x28] sm:$0xff] %v2082
        %2221 = vst [vmem:[%s380 + $0x30] sm:$0xff] %v2087
        %2222 = vst [vmem:[%s380 + $0x38] sm:$0xff] %v2092
        %2223 = vst [vmem:[%s380 + $0x40] sm:$0xff] %v2097
        %2224 = vst [vmem:[%s380 + $0x48] sm:$0xff] %v2102
        %2225 = vst [vmem:[%s380 + $0x50] sm:$0xff] %v2107
        %2226 = vst [vmem:[%s380 + $0x58] sm:$0xff] %v2112
        %2227 = vst [vmem:[%s380 + $0x60] sm:$0xff] %v2117
        %2228 = vst [vmem:[%s380 + $0x68] sm:$0xff] %v2122
        %2229 = vst [vmem:[%s380 + $0x70] sm:$0xff] %v2127
        %2230 = vst [vmem:[%s380 + $0x78] sm:$0xff] %v2132
        %2231 = vst [vmem:[%s380 + $0x80] sm:$0xff] %v2137
        %2232 = vst [vmem:[%s380 + $0x88] sm:$0xff] %v2142
        %2233 = vst [vmem:[%s380 + $0x90] sm:$0xff] %v2147
        %2234 = vst [vmem:[%s380 + $0x98] sm:$0xff] %v2152
        %2235 = vst [vmem:[%s380 + $0xa0] sm:$0xff] %v2157
        %2236 = vst [vmem:[%s380 + $0xa8] sm:$0xff] %v2162
        %2237 = vst [vmem:[%s380 + $0xb0] sm:$0xff] %v2167
        %2238 = vst [vmem:[%s380 + $0xb8] sm:$0xff] %v2172
        %2239 = vst [vmem:[%s380 + $0xc0] sm:$0xff] %v2177
        %2240 = vst [vmem:[%s380 + $0xc8] sm:$0xff] %v2182
        %2241 = vst [vmem:[%s380 + $0xd0] sm:$0xff] %v2187
        %2242 = vst [vmem:[%s380 + $0xd8] sm:$0xff] %v2192
        %2243 = vst [vmem:[%s380 + $0xe0] sm:$0xff] %v2197
        %2244 = vst [vmem:[%s380 + $0xe8] sm:$0xff] %v2202
        %2245 = vst [vmem:[%s380 + $0xf0] sm:$0xff] %v2207
        %2246 = vst [vmem:[%s380 + $0xf8] sm:$0xff] %v2212
        %s2247 = sand.u32 %s269, 1
        %s2248 = scalar_lea.sflag [#allocation3], %s2247
        %s2249 = sand.u32 %s269, 1
        %s2250 = smul.addr %s2249, 256
        %s2251 = scalar_lea.vmem [#allocation2], %s2250
        // Predicated region
        $region65: #{tpu_custom_call.1} parent=63 // pred_check
          %p2252 = pneg %p279
        $region66: #{tpu_custom_call.1} parent=63 // pred_check_branch
          %2254 = sbr.rel (%p2252) target = $region68
        $region67: #{tpu_custom_call.1} parent=63 // pred_region
          %s2255 = smul.u32 32, %s25
          %s2257 = ssub.s32 4096, 4096
          %2258 = vsyncadd %s2248, %s2257
          %s2259 = smul.addr %s2255, 128
          %s2260 = scalar_lea.hbm %s11, %s2259
          %s2261 = sshll.u32 %s2251, 4
          %s2262 = int_to_ptr.vmem [resolvable:$true] %s2261
          %2267 = dma.vmem_to_hbm [thread:$0]  %s2262, 4096, %s2260, %s2248, 128, 128, 8
        $region68: #{tpu_custom_call.1} parent=63 // pred_fallthru
          _
      $region64: #{tpu_custom_call.1} parent=5 // pred_fallthru
        _
      %p2268 = scmp.le.s32.totalorder 2, %s20
      // Predicated region
      $region69: #{tpu_custom_call.1} parent=5 // pred_check
        %p2269 = pneg %p2268
      $region70: #{tpu_custom_call.1} parent=5 // pred_check_branch
        %2271 = sbr.rel (%p2269) target = $region72
      $region71: #{tpu_custom_call.1} parent=5 // pred_region
        %s2272 = ssub.s32 %s20, 2
        // Predicated region
        $region73: #{tpu_custom_call.1} parent=71 // pred_check
          %p2273 = pneg %p285
        $region74: #{tpu_custom_call.1} parent=71 // pred_check_branch
          %2275 = sbr.rel (%p2273) target = $region76
        $region75: #{tpu_custom_call.1} parent=71 // pred_region
          %s2276 = sand.u32 %s270, 1
          %s2277 = scalar_lea.sflag [#allocation3], %s2276
          %s2278 = sand.u32 %s270, 1
          %s2279 = smul.addr %s2278, 256
          %s2280 = scalar_lea.vmem [#allocation2], %s2279
          %2281 = dma.done %s2277, 4096
        $region76: #{tpu_custom_call.1} parent=71 // pred_fallthru
          _
      $region72: #{tpu_custom_call.1} parent=5 // pred_fallthru
        _
    $region6: #{tpu_custom_call.1} parent=1 // loop_footer
      %s24 = sadd.s32 1, %s20
    $region7: #{tpu_custom_call.1} parent=1 // loop_footer_branch
      %19 = sbr.rel target = $region3
    $region8: #{tpu_custom_call.1} parent=1 // loop_exit
      _
    %2282 = vsyncpa [#allocation3], 1
    %s2283 = scalar_lea.sflag [#allocation3], 1
    %2284 = vsyncpa %s2283, 1

</llo_original>
